<compile_context>
chip_gen: v5e
topology: v5e:2x2
jax: 0.10.0
libtpu: 0.0.40
codegen_flags: <defaults>
</compile_context>

<pallas_src>
import functools

import jax
import jax.numpy as jnp
from jax.experimental import pallas as pl
from jax.experimental.pallas import tpu as pltpu

_MB = 1024 * 1024


def _round_up(v, m):
    return ((v + m - 1) // m) * m


def _device_kind():
    try:
        return jax.devices()[0].device_kind.lower()
    except Exception:
        return ""


def _pow_gamma(x, gamma):
    """x**gamma, specialized to repeated VPU multiplies for small integer gamma."""
    g = float(gamma)
    if g == round(g) and 0.0 <= g <= 8.0:
        k = int(round(g))
        if k == 0:
            return jnp.ones_like(x)
        out = x
        for _ in range(k - 1):
            out = out * x
        return out
    return jnp.power(x, g)


def _one_minus_exp_neg(ce):
    """1 - exp(-ce) for ce >= 0, accurate for small ce (Kahan expm1 trick).

    Uses only exp/log/div/select (guaranteed Mosaic lowerings); runs on the
    (block_n, 1) column only, so the extra EUP/VPU work is negligible.
    """
    u = jnp.exp(-ce)                                   # in [0, 1]
    one_minus_u = 1.0 - u
    log_u = jnp.log(jnp.where(u > 0.0, u, 1.0))        # ~= -ce after rounding
    denom = jnp.where(log_u != 0.0, -log_u, 1.0)
    kahan = one_minus_u * ce / denom
    return jnp.where(one_minus_u == 0.0, ce,           # ce ~ 0 limit: 1-exp(-ce) ~ ce
                     jnp.where(u > 0.0, kahan, 1.0))   # exp underflow limit


def _focal_loss_kernel(*refs, gamma, n_total, block_n, tiles_per_split, has_weight):
    if has_weight:
        x_ref, t_ref, w_ref, o_ref, acc_ref = refs
    else:
        x_ref, t_ref, o_ref, acc_ref = refs
        w_ref = None

    p = pl.program_id(0)   # TensorCore split (parallel axis)
    j = pl.program_id(1)   # batch tile within the split (accumulating axis)

    @pl.when(j == 0)
    def _():
        acc_ref[...] = jnp.zeros_like(acc_ref)

    logits = x_ref[...].astype(jnp.float32)                     # (TN, C)
    tgt = t_ref[...]                                            # (TN, 1) int32

    # numerically stable log-softmax pieces
    m = jnp.max(logits, axis=-1, keepdims=True)                 # (TN, 1)
    z = logits - m                                              # (TN, C)
    lse = jnp.log(jnp.sum(jnp.exp(z), axis=-1, keepdims=True))  # (TN, 1)

    # gather target logit via where-select masked sum (no one-hot f32 multiply)
    col = jax.lax.broadcasted_iota(jnp.int32, logits.shape, 1)  # (TN, C)
    tgt_z = jnp.sum(jnp.where(col == tgt, z, 0.0), axis=-1, keepdims=True)

    ce = lse - tgt_z                                            # per-sample CE
    if has_weight:
        ce = w_ref[...].astype(jnp.float32) * ce                # alpha[target], gathered in wrapper

    one_minus_pt = _one_minus_exp_neg(ce)
    focal = _pow_gamma(one_minus_pt, gamma) * ce                # (TN, 1)

    # Mask rows past the true batch size.  Edge / duplicated (clamped) tiles may
    # contain garbage; the select below discards it (no NaN propagation from the
    # unselected branch), so no wrapper-side zero padding is needed.
    row = (p * tiles_per_split + j) * block_n + jax.lax.broadcasted_iota(
        jnp.int32, focal.shape, 0)
    focal = jnp.where(row < n_total, focal, 0.0)

    # per-step scalar accumulation into a tiny (1,1) scratch
    acc_ref[...] = acc_ref[...] + jnp.sum(focal).reshape(1, 1)

    @pl.when(j == pl.num_programs(1) - 1)
    def _():
        # per-split partial sum; wrapper finishes sum / mean
        o_ref[...] = acc_ref[...].reshape(1, 1, 1)


def _focal_loss_xla(inputs, targets, alpha=None, gamma=2.0, reduction="mean"):
    """Plain-JAX path, identical math (used for small C and as test reference)."""
    x = inputs.astype(jnp.float32)
    logp = jax.nn.log_softmax(x, axis=-1)
    n, c = x.shape
    w = jnp.ones((c,), jnp.float32) if alpha is None else jnp.asarray(alpha, jnp.float32)
    t = targets.astype(jnp.int32)
    ce = -w[t] * jnp.take_along_axis(logp, t[:, None], axis=-1)[:, 0]
    pt = jnp.exp(-ce)
    fl = (1.0 - pt) ** gamma * ce
    if reduction == "mean":
        return fl.mean()
    if reduction == "sum":
        return fl.sum()
    return fl


def focal_loss(inputs, targets, alpha=None, gamma=2.0, reduction="mean",
               block_n=None, num_splits=None, vmem_tile_budget_bytes=None,
               small_c_fallback=64):
    """Focal loss forward. inputs: (N, C) float (f32/bf16), targets: (N,) int."""
    if reduction not in ("mean", "sum"):
        # TODO(synk): reduction='none' (per-sample (N,) output) is not fused in the Pallas path.
        raise NotImplementedError("only reduction in {'mean','sum'} is supported")

    n, c = inputs.shape
    has_weight = alpha is not None

    # Very small class counts use only a few of the 128 lanes; dispatch to XLA.
    if c < small_c_fallback:
        return _focal_loss_xla(inputs, targets, alpha=alpha, gamma=gamma, reduction=reduction)

    kind = _device_kind()
    itemsize = jnp.dtype(inputs.dtype).itemsize
    c_lanes = _round_up(max(c, 128), 128)           # lane padding of the C axis

    # Per-row VMEM footprint: double-buffered logits stream, f32 in-kernel
    # temporaries at lane-padded C, and the lane-padded (block_n,1) aux buffers.
    per_row_bytes = (2 * c_lanes * itemsize                 # logits (x2 buffers)
                     + 3 * c_lanes * 4                      # f32 temporaries (z/exp/select)
                     + 2 * 128 * 4                          # targets (x2 buffers, lane pad)
                     + (2 * 128 * 4 if has_weight else 0))  # per-sample weights

    if vmem_tile_budget_bytes is None:
        if "v5" in kind:
            vmem_tile_budget_bytes = 12 * _MB   # v5e default scoped VMEM is 16 MiB
        elif "v7" in kind:
            vmem_tile_budget_bytes = 20 * _MB   # v7x: only 64 MiB physical per TC
        else:
            vmem_tile_budget_bytes = 24 * _MB   # v6e & others: plenty of headroom

    if block_n is None:
        block_n = min(2048, vmem_tile_budget_bytes // per_row_bytes, _round_up(n, 8))
    block_n = max(8, (int(block_n) // 8) * 8)

    n_tiles = pl.cdiv(n, block_n)
    if num_splits is None:
        num_splits = 2 if "v7" in kind else 1   # only v7x has 2 TensorCores/chip
    num_splits = int(max(1, min(num_splits, n_tiles)))
    tiles_per_split = pl.cdiv(n_tiles, num_splits)

    targets2d = targets.astype(jnp.int32).reshape(n, 1)

    # Clamp edge/overflow tiles onto the last real tile; the in-kernel row mask
    # zeroes rows >= n, so NO wrapper-side padding (no extra HBM pass).
    def tile_idx(p, j):
        return (jnp.minimum(p * tiles_per_split + j, n_tiles - 1), 0)

    operands = [inputs, targets2d]
    in_specs = [
        pl.BlockSpec((block_n, c), tile_idx),   # logits tile (any float dtype)
        pl.BlockSpec((block_n, 1), tile_idx),   # target ids tile
    ]

    if has_weight:
        alpha_arr = jnp.asarray(alpha, dtype=jnp.float32).reshape(c)
        w = alpha_arr[targets.astype(jnp.int32)].reshape(n, 1)  # gather once, outside kernel
        operands.append(w)
        in_specs.append(pl.BlockSpec((block_n, 1), tile_idx))   # per-sample weight tile

    kernel = functools.partial(
        _focal_loss_kernel,
        gamma=float(gamma), n_total=n, block_n=block_n,
        tiles_per_split=tiles_per_split, has_weight=has_weight)

    vmem_limit = int(min(48 * _MB, max(32 * _MB, per_row_bytes * block_n + 8 * _MB)))

    partials = pl.pallas_call(
        kernel,
        out_shape=jax.ShapeDtypeStruct((num_splits, 1, 1), jnp.float32),
        grid_spec=pltpu.PrefetchScalarGridSpec(
            num_scalar_prefetch=0,
            grid=(num_splits, tiles_per_split),
            in_specs=in_specs,
            out_specs=pl.BlockSpec((1, 1, 1), lambda p, j: (p, 0, 0)),
            scratch_shapes=[pltpu.VMEM((1, 1), jnp.float32)],
        ),
        compiler_params=pltpu.CompilerParams(
            dimension_semantics=("parallel", "arbitrary"),
            vmem_limit_bytes=vmem_limit,
        ),
    )(*operands)

    total = jnp.sum(partials)
    if reduction == "mean":
        return total / jnp.float32(n)
    return total


if __name__ == "__main__":
    key = jax.random.PRNGKey(0)
    k_x, k_t, k_a = jax.random.split(key, 3)

    # Module-implied shapes: (N, C) logits + (N,) integer class targets.
    N, C = 256, 128
    logits = jax.random.normal(k_x, (N, C), dtype=jnp.float32)
    targets = jax.random.randint(k_t, (N,), 0, C, dtype=jnp.int32)

    # 1) Module defaults: alpha=None, gamma=2.0, reduction='mean', auto tile size.
    loss = jax.block_until_ready(focal_loss(logits, targets))
    ref = _focal_loss_xla(logits, targets)
    assert jnp.allclose(loss, ref, rtol=1e-5, atol=1e-5), (loss, ref)

    # 2) Ragged N (un-padded edge tile), alpha weights, reduction='sum',
    #    small tile + forced 2-way split: exercises clamped tiles + row mask.
    alpha_vec = jax.random.uniform(k_a, (C,), minval=0.5, maxval=1.5, dtype=jnp.float32)
    n2 = 100
    loss2 = jax.block_until_ready(
        focal_loss(logits[:n2], targets[:n2], alpha=alpha_vec, gamma=2.0,
                   reduction="sum", block_n=32, num_splits=2))
    ref2 = _focal_loss_xla(logits[:n2], targets[:n2], alpha=alpha_vec, gamma=2.0,
                           reduction="sum")
    assert jnp.allclose(loss2, ref2, rtol=1e-5, atol=1e-4), (loss2, ref2)

    # 3) bf16 logits + tiny class count forced through the Pallas path
    #    (lane dim < 128 allowed because the block covers the full C axis).
    C3 = 16
    logits3 = jax.random.normal(k_x, (64, C3), dtype=jnp.bfloat16)
    targets3 = jax.random.randint(k_t, (64,), 0, C3, dtype=jnp.int32)
    loss3 = jax.block_until_ready(focal_loss(logits3, targets3, small_c_fallback=0))
    ref3 = _focal_loss_xla(logits3.astype(jnp.float32), targets3)
    assert jnp.allclose(loss3, ref3, rtol=1e-5, atol=1e-5), (loss3, ref3)

    # 4) Default small-C dispatch (XLA path) — identical semantics.
    loss4 = jax.block_until_ready(focal_loss(logits3, targets3))
    assert jnp.allclose(loss4, ref3, rtol=1e-5, atol=1e-5), (loss4, ref3)

    print("KERNEL_OK")
</pallas_src>

<mosaic_0001>
module attributes {stable_mosaic.version = 11 : i64} {
  func.func @_focal_loss_kernel(%arg0: i32, %arg1: i32, %arg2: memref<256x128xf32, #tpu.memory_space<vmem>>, %arg3: memref<256x1xi32, #tpu.memory_space<vmem>>, %arg4: memref<1x1x1xf32, #tpu.memory_space<vmem>>, %arg5: memref<1x1xf32, #tpu.memory_space<vmem>>) attributes {dimension_semantics = [#tpu.dimension_semantics<parallel>, #tpu.dimension_semantics<arbitrary>], iteration_bounds = array<i64: 1, 1>, scalar_prefetch = 0 : i64, scratch_operands = 1 : i64, tpu.core_type = #tpu.core_type<tc>, window_params = [{transform_indices = @transform_0, window_bounds = array<i64: 256, 128>}, {transform_indices = @transform_1, window_bounds = array<i64: 256, 1>}, {transform_indices = @transform_2, window_bounds = array<i64: 1, 1, 1>}]} {
    %c0_i32 = arith.constant 0 : i32
    %0 = arith.cmpi eq, %arg1, %c0_i32 : i32
    %1 = arith.extui %0 : i1 to i32
    %c0_i32_0 = arith.constant 0 : i32
    %2 = arith.cmpi ne, %1, %c0_i32_0 : i32
    scf.if %2 {
      %cst_26 = arith.constant 0.000000e+00 : f32
      %69 = vector.broadcast %cst_26 : f32 to vector<1x1xf32>
      %c0_27 = arith.constant 0 : index
      %c0_28 = arith.constant 0 : index
      %70 = vector.load %arg5[%c0_27, %c0_28] : memref<1x1xf32, #tpu.memory_space<vmem>>, vector<1x1xf32>
      tpu.vector_store %arg5[%c0_27, %c0_28], %69 {strides = array<i32>} : memref<1x1xf32, #tpu.memory_space<vmem>>, vector<1x1xf32>,
    } else {
    }
    %c0 = arith.constant 0 : index
    %c0_1 = arith.constant 0 : index
    %3 = vector.load %arg2[%c0, %c0_1] : memref<256x128xf32, #tpu.memory_space<vmem>>, vector<256x128xf32>
    %c0_2 = arith.constant 0 : index
    %c0_3 = arith.constant 0 : index
    %4 = vector.load %arg3[%c0_2, %c0_3] : memref<256x1xi32, #tpu.memory_space<vmem>>, vector<256x1xi32>
    %cst = arith.constant dense<0xFF800000> : vector<256xf32>
    %5 = vector.multi_reduction <maximumf>, %3, %cst [1] : vector<256x128xf32> to vector<256xf32>
    %6 = vector.shape_cast %5 : vector<256xf32> to vector<256x1xf32>
    %7 = vector.broadcast %6 : vector<256x1xf32> to vector<256x128xf32>
    %8 = arith.subf %3, %7 : vector<256x128xf32>
    %9 = math.exp %8 : vector<256x128xf32>
    %cst_4 = arith.constant dense<0.000000e+00> : vector<256xf32>
    %10 = vector.multi_reduction <add>, %9, %cst_4 [1] : vector<256x128xf32> to vector<256xf32>
    %11 = vector.shape_cast %10 : vector<256xf32> to vector<256x1xf32>
    %12 = math.log %11 : vector<256x1xf32>
    %13 = tpu.iota {dimensions = array<i32: 1>} : vector<256x128xi32>
    %14 = vector.broadcast %4 : vector<256x1xi32> to vector<256x128xi32>
    %15 = arith.cmpi eq, %13, %14 : vector<256x128xi32>
    %cst_5 = arith.constant 0.000000e+00 : f32
    %16 = vector.broadcast %cst_5 : f32 to vector<256x128xf32>
    %17 = arith.select %15, %8, %16 : vector<256x128xi1>, vector<256x128xf32>
    %cst_6 = arith.constant dense<0.000000e+00> : vector<256xf32>
    %18 = vector.multi_reduction <add>, %17, %cst_6 [1] : vector<256x128xf32> to vector<256xf32>
    %19 = vector.shape_cast %18 : vector<256xf32> to vector<256x1xf32>
    %20 = arith.subf %12, %19 : vector<256x1xf32>
    %cst_7 = arith.constant 0.000000e+00 : f32
    %21 = vector.broadcast %cst_7 : f32 to vector<256x1xf32>
    %22 = arith.subf %21, %20 : vector<256x1xf32>
    %23 = math.exp %22 : vector<256x1xf32>
    %cst_8 = arith.constant 1.000000e+00 : f32
    %24 = vector.broadcast %cst_8 : f32 to vector<256x1xf32>
    %25 = arith.subf %24, %23 : vector<256x1xf32>
    %cst_9 = arith.constant 0.000000e+00 : f32
    %26 = vector.broadcast %cst_9 : f32 to vector<256x1xf32>
    %27 = arith.cmpf ogt, %23, %26 : vector<256x1xf32>
    %cst_10 = arith.constant 1.000000e+00 : f32
    %28 = vector.broadcast %cst_10 : f32 to vector<256x1xf32>
    %29 = arith.select %27, %23, %28 : vector<256x1xi1>, vector<256x1xf32>
    %30 = math.log %29 : vector<256x1xf32>
    %cst_11 = arith.constant 0.000000e+00 : f32
    %31 = vector.broadcast %cst_11 : f32 to vector<256x1xf32>
    %32 = arith.cmpf one, %30, %31 : vector<256x1xf32>
    %cst_12 = arith.constant 0.000000e+00 : f32
    %33 = vector.broadcast %cst_12 : f32 to vector<256x1xf32>
    %34 = arith.subf %33, %30 : vector<256x1xf32>
    %cst_13 = arith.constant 1.000000e+00 : f32
    %35 = vector.broadcast %cst_13 : f32 to vector<256x1xf32>
    %36 = arith.select %32, %34, %35 : vector<256x1xi1>, vector<256x1xf32>
    %37 = arith.mulf %25, %20 : vector<256x1xf32>
    %38 = arith.divf %37, %36 : vector<256x1xf32>
    %cst_14 = arith.constant 0.000000e+00 : f32
    %39 = vector.broadcast %cst_14 : f32 to vector<256x1xf32>
    %40 = arith.cmpf oeq, %25, %39 : vector<256x1xf32>
    %cst_15 = arith.constant 0.000000e+00 : f32
    %41 = vector.broadcast %cst_15 : f32 to vector<256x1xf32>
    %42 = arith.cmpf ogt, %23, %41 : vector<256x1xf32>
    %cst_16 = arith.constant 1.000000e+00 : f32
    %43 = vector.broadcast %cst_16 : f32 to vector<256x1xf32>
    %44 = arith.select %42, %38, %43 : vector<256x1xi1>, vector<256x1xf32>
    %45 = arith.select %40, %20, %44 : vector<256x1xi1>, vector<256x1xf32>
    %46 = arith.mulf %45, %45 : vector<256x1xf32>
    %47 = arith.mulf %46, %20 : vector<256x1xf32>
    %c1_i32 = arith.constant 1 : i32
    %48 = arith.muli %arg0, %c1_i32 : i32
    %49 = arith.addi %48, %arg1 : i32
    %c256_i32 = arith.constant 256 : i32
    %50 = arith.muli %49, %c256_i32 : i32
    %51 = tpu.iota {dimensions = array<i32: 0>} : vector<256x1xi32>
    %52 = vector.broadcast %50 : i32 to vector<256x1xi32>
    %53 = arith.addi %52, %51 : vector<256x1xi32>
    %c256_i32_17 = arith.constant 256 : i32
    %54 = vector.broadcast %c256_i32_17 : i32 to vector<256x1xi32>
    %55 = arith.cmpi slt, %53, %54 : vector<256x1xi32>
    %cst_18 = arith.constant 0.000000e+00 : f32
    %56 = vector.broadcast %cst_18 : f32 to vector<256x1xf32>
    %57 = arith.select %55, %47, %56 : vector<256x1xi1>, vector<256x1xf32>
    %c0_19 = arith.constant 0 : index
    %c0_20 = arith.constant 0 : index
    %58 = vector.load %arg5[%c0_19, %c0_20] : memref<1x1xf32, #tpu.memory_space<vmem>>, vector<1x1xf32>
    %59 = vector.shape_cast %57 : vector<256x1xf32> to vector<1x256x1xf32>
    %cst_21 = arith.constant dense<0.000000e+00> : vector<1xf32>
    %60 = vector.multi_reduction <add>, %59, %cst_21 [1, 2] : vector<1x256x1xf32> to vector<1xf32>
    %61 = vector.shape_cast %60 : vector<1xf32> to vector<1x1x1xf32>
    %62 = vector.extract %61[0, 0, 0] : f32 from vector<1x1x1xf32>
    %63 = vector.broadcast %62 : f32 to vector<1x1xf32>
    %64 = arith.addf %58, %63 : vector<1x1xf32>
    %c0_22 = arith.constant 0 : index
    %c0_23 = arith.constant 0 : index
    %65 = vector.load %arg5[%c0_22, %c0_23] : memref<1x1xf32, #tpu.memory_space<vmem>>, vector<1x1xf32>
    tpu.vector_store %arg5[%c0_22, %c0_23], %64 {strides = array<i32>} : memref<1x1xf32, #tpu.memory_space<vmem>>, vector<1x1xf32>,
    %c0_i32_24 = arith.constant 0 : i32
    %66 = arith.cmpi eq, %arg1, %c0_i32_24 : i32
    %67 = arith.extui %66 : i1 to i32
    %c0_i32_25 = arith.constant 0 : i32
    %68 = arith.cmpi ne, %67, %c0_i32_25 : i32
    scf.if %68 {
      %c0_26 = arith.constant 0 : index
      %c0_27 = arith.constant 0 : index
      %69 = vector.load %arg5[%c0_26, %c0_27] : memref<1x1xf32, #tpu.memory_space<vmem>>, vector<1x1xf32>
      %70 = vector.shape_cast %69 : vector<1x1xf32> to vector<1x1x1xf32>
      %c0_28 = arith.constant 0 : index
      %c0_29 = arith.constant 0 : index
      %c0_30 = arith.constant 0 : index
      %71 = vector.load %arg4[%c0_28, %c0_29, %c0_30] : memref<1x1x1xf32, #tpu.memory_space<vmem>>, vector<1x1x1xf32>
      tpu.vector_store %arg4[%c0_28, %c0_29, %c0_30], %70 {strides = array<i32>} : memref<1x1x1xf32, #tpu.memory_space<vmem>>, vector<1x1x1xf32>,
    } else {
    }
    return
  }
  func.func @transform_0(%arg0: i32, %arg1: i32) -> (i32, i32) {
    %c1_i32 = arith.constant 1 : i32
    %0 = arith.muli %arg0, %c1_i32 : i32
    %1 = arith.addi %0, %arg1 : i32
    %c0_i32 = arith.constant 0 : i32
    %2 = arith.minsi %1, %c0_i32 : i32
    %c0_i32_0 = arith.constant 0 : i32
    %c0_i32_1 = arith.constant 0 : i32
    return %2, %c0_i32_0 : i32, i32
  }
  func.func @transform_1(%arg0: i32, %arg1: i32) -> (i32, i32) {
    %c1_i32 = arith.constant 1 : i32
    %0 = arith.muli %arg0, %c1_i32 : i32
    %1 = arith.addi %0, %arg1 : i32
    %c0_i32 = arith.constant 0 : i32
    %2 = arith.minsi %1, %c0_i32 : i32
    %c0_i32_0 = arith.constant 0 : i32
    %c0_i32_1 = arith.constant 0 : i32
    return %2, %c0_i32_0 : i32, i32
  }
  func.func @transform_2(%arg0: i32, %arg1: i32) -> (i32, i32, i32) {
    %c0_i32 = arith.constant 0 : i32
    %c0_i32_0 = arith.constant 0 : i32
    %c0_i32_1 = arith.constant 0 : i32
    return %arg0, %c0_i32, %c0_i32_0 : i32, i32, i32
  }
}

</mosaic_0001>

<llo_original>
// kernel: tpu_custom_call.1
$region0: #{tpu_custom_call.1}
  #allocation0 [shape = 'u32[]', space=smem, size = 0x4, offset = 0x4, fixed_abs, tag = 'smem constant byte address 0x4 - core index']
  #allocation1 [shape = 'u32[72,128]{1,0:T(1,128)}', space=vmem, size = 0x9000, scoped, tag = 'internal scratch']
  #allocation2 [shape = 'f32[1,1]{1,0:T(1,128)}', space=vmem, size = 0x200, scoped, tag = 'scratch operand']
  %s0 = inlined_call_operand.vmem [shape: f32[256,128], index: 0, kind: input, shape index: {}]
  %s1 = inlined_call_operand.vmem [shape: s32[256,1], index: 1, kind: input, shape index: {}]
  %s2 = inlined_call_operand.hbm [shape: f32[1,1,1], index: 2, kind: output, shape index: {}]
  %s3 = sld [smem:[#allocation0]]
  $region26: #{tpu_custom_call.1} parent=0
    _
  %s5 = ssub.s32 1, %s3
  %s6 = scalar_select 0, %s5, %s3
  $region1: #{tpu_custom_call.1} parent=0
    #allocation3 [shape = 'u8[512]{0}', space=vmem, size = 0x400, scoped, tag = 'output window, operand 0, single buffered']
    #allocation4 [shape = 's32[1]{0}', space=sflag, size = 0x4, scoped, tag = 'scoped memory for tpu_custom_call.1']
    %7 = vsyncpa [#allocation4], 0
    // Predicated region
    $region2: #{tpu_custom_call.1} parent=1 // pred_check
      _
    $region3: #{tpu_custom_call.1} parent=1 // pred_check_branch
      %9 = sbr.rel (0) target = $region5
    $region4: #{tpu_custom_call.1} parent=1 // pred_region
      %s10 = sadd.s32 0, 0
      %p11 = scmp.lt.s32.totalorder %s10, 0
      %s12 = scalar_select %p11, %s10, 0
      %s13 = smul.u32 32, %s12
      %p14 = scmp.lt.s32.totalorder %s13, 31
      %s15 = scalar_select %p14, %s13, 31
      %s16 = smul.addr %s15, 8
      %s17 = scalar_lea.vmem %s0, %s16
      %s18 = sadd.s32 0, 0
      %p19 = scmp.lt.s32.totalorder %s18, 0
      %s20 = scalar_select %p19, %s18, 0
      %s21 = smul.u32 32, %s20
    $region5: #{tpu_custom_call.1} parent=1 // pred_fallthru
      _
    // Predicated region
    $region6: #{tpu_custom_call.1} parent=1 // pred_check
      _
    $region7: #{tpu_custom_call.1} parent=1 // pred_check_branch
      %23 = sbr.rel (0) target = $region9
    $region8: #{tpu_custom_call.1} parent=1 // pred_region
      %s24 = sadd.s32 0, 0
      %p25 = scmp.lt.s32.totalorder %s24, 0
      %s26 = scalar_select %p25, %s24, 0
      %s27 = smul.u32 32, %s26
      %p28 = scmp.lt.s32.totalorder %s27, 31
      %s29 = scalar_select %p28, %s27, 31
      %s30 = smul.addr %s29, 8
      %s31 = scalar_lea.vmem %s1, %s30
      %s32 = sadd.s32 0, 0
      %p33 = scmp.lt.s32.totalorder %s32, 0
      %s34 = scalar_select %p33, %s32, 0
      %s35 = smul.u32 32, %s34
    $region9: #{tpu_custom_call.1} parent=1 // pred_fallthru
      _
    %s36 = sadd.s32 0, 0
    %p37 = scmp.lt.s32.totalorder %s36, 0
    %s38 = scalar_select %p37, %s36, 0
    %s39 = smul.u32 32, %s38
    %p40 = scmp.lt.s32.totalorder %s39, 31
    %s41 = scalar_select %p40, %s39, 31
    %s42 = smul.addr %s41, 8
    %s43 = scalar_lea.vmem %s0, %s42
    %s44 = sadd.s32 0, 0
    %p45 = scmp.lt.s32.totalorder %s44, 0
    %s46 = scalar_select %p45, %s44, 0
    %s47 = smul.u32 32, %s46
    %p48 = scmp.lt.s32.totalorder %s47, 31
    %s49 = scalar_select %p48, %s47, 31
    %s50 = smul.addr %s49, 8
    %s51 = scalar_lea.vmem %s1, %s50
    %s52 = sadd.s32 0, 0
    %p53 = scmp.lt.s32.totalorder %s52, 0
    %s54 = scalar_select %p53, %s52, 0
    %s55 = smul.u32 32, %s54
    %p56 = scmp.lt.s32.totalorder %s55, 31
    %s57 = scalar_select %p56, %s55, 31
    %s58 = smul.addr %s57, 8
    %s59 = scalar_lea.vmem %s0, %s58
    %s60 = sadd.s32 0, 0
    %p61 = scmp.lt.s32.totalorder %s60, 0
    %s62 = scalar_select %p61, %s60, 0
    %s63 = smul.u32 32, %s62
    %s64 = sadd.s32 0, 0
    %p65 = scmp.lt.s32.totalorder %s64, 0
    %s66 = scalar_select %p65, %s64, 0
    %s67 = smul.u32 32, %s66
    %p68 = scmp.lt.s32.totalorder %s67, 31
    %s69 = scalar_select %p68, %s67, 31
    %s70 = smul.addr %s69, 8
    %s71 = scalar_lea.vmem %s1, %s70
    %s72 = sadd.s32 0, 0
    %p73 = scmp.lt.s32.totalorder %s72, 0
    %s74 = scalar_select %p73, %s72, 0
    %s75 = smul.u32 32, %s74
    %p76 = scmp.eq.s32.totalorder 0, 0
    // Predicated region
    $region10: #{tpu_custom_call.1} parent=1 // pred_check
      %p77 = pneg %p76
    $region11: #{tpu_custom_call.1} parent=1 // pred_check_branch
      %79 = sbr.rel (%p77) target = $region13
    $region12: #{tpu_custom_call.1} parent=1 // pred_region
      %vm80 = vcmask 0
      %81 = vst.msk [vmem:[#allocation2] sm:$0x1] %vm80, 0.0
    $region13: #{tpu_custom_call.1} parent=1 // pred_fallthru
      _
    %v82 = vld [vmem:[%s59] sm:$0xff]
    %v83 = vld [vmem:[%s59 + $0x8] sm:$0xff]
    %v84 = vld [vmem:[%s59 + $0x10] sm:$0xff]
    %v85 = vld [vmem:[%s59 + $0x18] sm:$0xff]
    %v86 = vld [vmem:[%s59 + $0x20] sm:$0xff]
    %v87 = vld [vmem:[%s59 + $0x28] sm:$0xff]
    %v88 = vld [vmem:[%s59 + $0x30] sm:$0xff]
    %v89 = vld [vmem:[%s59 + $0x38] sm:$0xff]
    %v90 = vld [vmem:[%s59 + $0x40] sm:$0xff]
    %v91 = vld [vmem:[%s59 + $0x48] sm:$0xff]
    %v92 = vld [vmem:[%s59 + $0x50] sm:$0xff]
    %v93 = vld [vmem:[%s59 + $0x58] sm:$0xff]
    %v94 = vld [vmem:[%s59 + $0x60] sm:$0xff]
    %v95 = vld [vmem:[%s59 + $0x68] sm:$0xff]
    %v96 = vld [vmem:[%s59 + $0x70] sm:$0xff]
    %v97 = vld [vmem:[%s59 + $0x78] sm:$0xff]
    %v98 = vld [vmem:[%s59 + $0x80] sm:$0xff]
    %v99 = vld [vmem:[%s59 + $0x88] sm:$0xff]
    %v100 = vld [vmem:[%s59 + $0x90] sm:$0xff]
    %v101 = vld [vmem:[%s59 + $0x98] sm:$0xff]
    %v102 = vld [vmem:[%s59 + $0xa0] sm:$0xff]
    %v103 = vld [vmem:[%s59 + $0xa8] sm:$0xff]
    %v104 = vld [vmem:[%s59 + $0xb0] sm:$0xff]
    %v105 = vld [vmem:[%s59 + $0xb8] sm:$0xff]
    %v106 = vld [vmem:[%s59 + $0xc0] sm:$0xff]
    %v107 = vld [vmem:[%s59 + $0xc8] sm:$0xff]
    %v108 = vld [vmem:[%s59 + $0xd0] sm:$0xff]
    %v109 = vld [vmem:[%s59 + $0xd8] sm:$0xff]
    %v110 = vld [vmem:[%s59 + $0xe0] sm:$0xff]
    %v111 = vld [vmem:[%s59 + $0xe8] sm:$0xff]
    %v112 = vld [vmem:[%s59 + $0xf0] sm:$0xff]
    %v113 = vld [vmem:[%s59 + $0xf8] sm:$0xff]
    %v114 = vld [vmem:[%s71] sm:$0xff]
    %v115 = vld [vmem:[%s71 + $0x8] sm:$0xff]
    %v116 = vld [vmem:[%s71 + $0x10] sm:$0xff]
    %v117 = vld [vmem:[%s71 + $0x18] sm:$0xff]
    %v118 = vld [vmem:[%s71 + $0x20] sm:$0xff]
    %v119 = vld [vmem:[%s71 + $0x28] sm:$0xff]
    %v120 = vld [vmem:[%s71 + $0x30] sm:$0xff]
    %v121 = vld [vmem:[%s71 + $0x38] sm:$0xff]
    %v122 = vld [vmem:[%s71 + $0x40] sm:$0xff]
    %v123 = vld [vmem:[%s71 + $0x48] sm:$0xff]
    %v124 = vld [vmem:[%s71 + $0x50] sm:$0xff]
    %v125 = vld [vmem:[%s71 + $0x58] sm:$0xff]
    %v126 = vld [vmem:[%s71 + $0x60] sm:$0xff]
    %v127 = vld [vmem:[%s71 + $0x68] sm:$0xff]
    %v128 = vld [vmem:[%s71 + $0x70] sm:$0xff]
    %v129 = vld [vmem:[%s71 + $0x78] sm:$0xff]
    %v130 = vld [vmem:[%s71 + $0x80] sm:$0xff]
    %v131 = vld [vmem:[%s71 + $0x88] sm:$0xff]
    %v132 = vld [vmem:[%s71 + $0x90] sm:$0xff]
    %v133 = vld [vmem:[%s71 + $0x98] sm:$0xff]
    %v134 = vld [vmem:[%s71 + $0xa0] sm:$0xff]
    %v135 = vld [vmem:[%s71 + $0xa8] sm:$0xff]
    %v136 = vld [vmem:[%s71 + $0xb0] sm:$0xff]
    %v137 = vld [vmem:[%s71 + $0xb8] sm:$0xff]
    %v138 = vld [vmem:[%s71 + $0xc0] sm:$0xff]
    %v139 = vld [vmem:[%s71 + $0xc8] sm:$0xff]
    %v140 = vld [vmem:[%s71 + $0xd0] sm:$0xff]
    %v141 = vld [vmem:[%s71 + $0xd8] sm:$0xff]
    %v142 = vld [vmem:[%s71 + $0xe0] sm:$0xff]
    %v143 = vld [vmem:[%s71 + $0xe8] sm:$0xff]
    %v144 = vld [vmem:[%s71 + $0xf0] sm:$0xff]
    %v145 = vld [vmem:[%s71 + $0xf8] sm:$0xff]
    %146 = vmax.xlane.f32.xlu0 %v82
    %v147 = vpop.xlane.xlu0 %146
    %148 = vmax.xlane.f32.xlu0 %v83
    %v149 = vpop.xlane.xlu0 %148
    %150 = vmax.xlane.f32.xlu0 %v84
    %v151 = vpop.xlane.xlu0 %150
    %152 = vmax.xlane.f32.xlu0 %v85
    %v153 = vpop.xlane.xlu0 %152
    %154 = vmax.xlane.f32.xlu0 %v86
    %v155 = vpop.xlane.xlu0 %154
    %156 = vmax.xlane.f32.xlu0 %v87
    %v157 = vpop.xlane.xlu0 %156
    %158 = vmax.xlane.f32.xlu0 %v88
    %v159 = vpop.xlane.xlu0 %158
    %160 = vmax.xlane.f32.xlu0 %v89
    %v161 = vpop.xlane.xlu0 %160
    %162 = vmax.xlane.f32.xlu0 %v90
    %v163 = vpop.xlane.xlu0 %162
    %164 = vmax.xlane.f32.xlu0 %v91
    %v165 = vpop.xlane.xlu0 %164
    %166 = vmax.xlane.f32.xlu0 %v92
    %v167 = vpop.xlane.xlu0 %166
    %168 = vmax.xlane.f32.xlu0 %v93
    %v169 = vpop.xlane.xlu0 %168
    %170 = vmax.xlane.f32.xlu0 %v94
    %v171 = vpop.xlane.xlu0 %170
    %172 = vmax.xlane.f32.xlu0 %v95
    %v173 = vpop.xlane.xlu0 %172
    %174 = vmax.xlane.f32.xlu0 %v96
    %v175 = vpop.xlane.xlu0 %174
    %176 = vmax.xlane.f32.xlu0 %v97
    %v177 = vpop.xlane.xlu0 %176
    %178 = vmax.xlane.f32.xlu0 %v98
    %v179 = vpop.xlane.xlu0 %178
    %180 = vmax.xlane.f32.xlu0 %v99
    %v181 = vpop.xlane.xlu0 %180
    %182 = vmax.xlane.f32.xlu0 %v100
    %v183 = vpop.xlane.xlu0 %182
    %184 = vmax.xlane.f32.xlu0 %v101
    %v185 = vpop.xlane.xlu0 %184
    %186 = vmax.xlane.f32.xlu0 %v102
    %v187 = vpop.xlane.xlu0 %186
    %188 = vmax.xlane.f32.xlu0 %v103
    %v189 = vpop.xlane.xlu0 %188
    %190 = vmax.xlane.f32.xlu0 %v104
    %v191 = vpop.xlane.xlu0 %190
    %192 = vmax.xlane.f32.xlu0 %v105
    %v193 = vpop.xlane.xlu0 %192
    %194 = vmax.xlane.f32.xlu0 %v106
    %v195 = vpop.xlane.xlu0 %194
    %196 = vmax.xlane.f32.xlu0 %v107
    %v197 = vpop.xlane.xlu0 %196
    %198 = vmax.xlane.f32.xlu0 %v108
    %v199 = vpop.xlane.xlu0 %198
    %200 = vmax.xlane.f32.xlu0 %v109
    %v201 = vpop.xlane.xlu0 %200
    %202 = vmax.xlane.f32.xlu0 %v110
    %v203 = vpop.xlane.xlu0 %202
    %204 = vmax.xlane.f32.xlu0 %v111
    %v205 = vpop.xlane.xlu0 %204
    %206 = vmax.xlane.f32.xlu0 %v112
    %v207 = vpop.xlane.xlu0 %206
    %208 = vmax.xlane.f32.xlu0 %v113
    %v209 = vpop.xlane.xlu0 %208
    %v210 = vsub.f32 %v82, %v147
    %v211 = vsub.f32 %v83, %v149
    %v212 = vsub.f32 %v84, %v151
    %v213 = vsub.f32 %v85, %v153
    %v214 = vsub.f32 %v86, %v155
    %v215 = vsub.f32 %v87, %v157
    %v216 = vsub.f32 %v88, %v159
    %v217 = vsub.f32 %v89, %v161
    %v218 = vsub.f32 %v90, %v163
    %v219 = vsub.f32 %v91, %v165
    %v220 = vsub.f32 %v92, %v167
    %v221 = vsub.f32 %v93, %v169
    %v222 = vsub.f32 %v94, %v171
    %v223 = vsub.f32 %v95, %v173
    %v224 = vsub.f32 %v96, %v175
    %v225 = vsub.f32 %v97, %v177
    %v226 = vsub.f32 %v98, %v179
    %v227 = vsub.f32 %v99, %v181
    %v228 = vsub.f32 %v100, %v183
    %v229 = vsub.f32 %v101, %v185
    %v230 = vsub.f32 %v102, %v187
    %v231 = vsub.f32 %v103, %v189
    %v232 = vsub.f32 %v104, %v191
    %v233 = vsub.f32 %v105, %v193
    %v234 = vsub.f32 %v106, %v195
    %v235 = vsub.f32 %v107, %v197
    %v236 = vsub.f32 %v108, %v199
    %v237 = vsub.f32 %v109, %v201
    %v238 = vsub.f32 %v110, %v203
    %v239 = vsub.f32 %v111, %v205
    %v240 = vsub.f32 %v112, %v207
    %v241 = vsub.f32 %v113, %v209
    %v242 = vmul.f32 %v210, 1.442695
    %v243 = vpow.pop %v242
    %v244 = vmul.f32 %v211, 1.442695
    %v245 = vpow.pop %v244
    %v246 = vmul.f32 %v212, 1.442695
    %v247 = vpow.pop %v246
    %v248 = vmul.f32 %v213, 1.442695
    %v249 = vpow.pop %v248
    %v250 = vmul.f32 %v214, 1.442695
    %v251 = vpow.pop %v250
    %v252 = vmul.f32 %v215, 1.442695
    %v253 = vpow.pop %v252
    %v254 = vmul.f32 %v216, 1.442695
    %v255 = vpow.pop %v254
    %v256 = vmul.f32 %v217, 1.442695
    %v257 = vpow.pop %v256
    %v258 = vmul.f32 %v218, 1.442695
    %v259 = vpow.pop %v258
    %v260 = vmul.f32 %v219, 1.442695
    %v261 = vpow.pop %v260
    %v262 = vmul.f32 %v220, 1.442695
    %v263 = vpow.pop %v262
    %v264 = vmul.f32 %v221, 1.442695
    %v265 = vpow.pop %v264
    %v266 = vmul.f32 %v222, 1.442695
    %v267 = vpow.pop %v266
    %v268 = vmul.f32 %v223, 1.442695
    %v269 = vpow.pop %v268
    %v270 = vmul.f32 %v224, 1.442695
    %v271 = vpow.pop %v270
    %v272 = vmul.f32 %v225, 1.442695
    %v273 = vpow.pop %v272
    %v274 = vmul.f32 %v226, 1.442695
    %v275 = vpow.pop %v274
    %v276 = vmul.f32 %v227, 1.442695
    %v277 = vpow.pop %v276
    %v278 = vmul.f32 %v228, 1.442695
    %v279 = vpow.pop %v278
    %v280 = vmul.f32 %v229, 1.442695
    %v281 = vpow.pop %v280
    %v282 = vmul.f32 %v230, 1.442695
    %v283 = vpow.pop %v282
    %v284 = vmul.f32 %v231, 1.442695
    %v285 = vpow.pop %v284
    %v286 = vmul.f32 %v232, 1.442695
    %v287 = vpow.pop %v286
    %v288 = vmul.f32 %v233, 1.442695
    %v289 = vpow.pop %v288
    %v290 = vmul.f32 %v234, 1.442695
    %v291 = vpow.pop %v290
    %v292 = vmul.f32 %v235, 1.442695
    %v293 = vpow.pop %v292
    %v294 = vmul.f32 %v236, 1.442695
    %v295 = vpow.pop %v294
    %v296 = vmul.f32 %v237, 1.442695
    %v297 = vpow.pop %v296
    %v298 = vmul.f32 %v238, 1.442695
    %v299 = vpow.pop %v298
    %v300 = vmul.f32 %v239, 1.442695
    %v301 = vpow.pop %v300
    %v302 = vmul.f32 %v240, 1.442695
    %v303 = vpow.pop %v302
    %v304 = vmul.f32 %v241, 1.442695
    %v305 = vpow.pop %v304
    %306 = vadd.xlane.f32.xlu0 %v243
    %v307 = vpop.xlane.xlu0 %306
    %308 = vadd.xlane.f32.xlu0 %v245
    %v309 = vpop.xlane.xlu0 %308
    %310 = vadd.xlane.f32.xlu0 %v247
    %v311 = vpop.xlane.xlu0 %310
    %312 = vadd.xlane.f32.xlu0 %v249
    %v313 = vpop.xlane.xlu0 %312
    %314 = vadd.xlane.f32.xlu0 %v251
    %v315 = vpop.xlane.xlu0 %314
    %316 = vadd.xlane.f32.xlu0 %v253
    %v317 = vpop.xlane.xlu0 %316
    %318 = vadd.xlane.f32.xlu0 %v255
    %v319 = vpop.xlane.xlu0 %318
    %320 = vadd.xlane.f32.xlu0 %v257
    %v321 = vpop.xlane.xlu0 %320
    %322 = vadd.xlane.f32.xlu0 %v259
    %v323 = vpop.xlane.xlu0 %322
    %324 = vadd.xlane.f32.xlu0 %v261
    %v325 = vpop.xlane.xlu0 %324
    %326 = vadd.xlane.f32.xlu0 %v263
    %v327 = vpop.xlane.xlu0 %326
    %328 = vadd.xlane.f32.xlu0 %v265
    %v329 = vpop.xlane.xlu0 %328
    %330 = vadd.xlane.f32.xlu0 %v267
    %v331 = vpop.xlane.xlu0 %330
    %332 = vadd.xlane.f32.xlu0 %v269
    %v333 = vpop.xlane.xlu0 %332
    %334 = vadd.xlane.f32.xlu0 %v271
    %v335 = vpop.xlane.xlu0 %334
    %336 = vadd.xlane.f32.xlu0 %v273
    %v337 = vpop.xlane.xlu0 %336
    %338 = vadd.xlane.f32.xlu0 %v275
    %v339 = vpop.xlane.xlu0 %338
    %340 = vadd.xlane.f32.xlu0 %v277
    %v341 = vpop.xlane.xlu0 %340
    %342 = vadd.xlane.f32.xlu0 %v279
    %v343 = vpop.xlane.xlu0 %342
    %344 = vadd.xlane.f32.xlu0 %v281
    %v345 = vpop.xlane.xlu0 %344
    %346 = vadd.xlane.f32.xlu0 %v283
    %v347 = vpop.xlane.xlu0 %346
    %348 = vadd.xlane.f32.xlu0 %v285
    %v349 = vpop.xlane.xlu0 %348
    %350 = vadd.xlane.f32.xlu0 %v287
    %v351 = vpop.xlane.xlu0 %350
    %352 = vadd.xlane.f32.xlu0 %v289
    %v353 = vpop.xlane.xlu0 %352
    %354 = vadd.xlane.f32.xlu0 %v291
    %v355 = vpop.xlane.xlu0 %354
    %356 = vadd.xlane.f32.xlu0 %v293
    %v357 = vpop.xlane.xlu0 %356
    %358 = vadd.xlane.f32.xlu0 %v295
    %v359 = vpop.xlane.xlu0 %358
    %360 = vadd.xlane.f32.xlu0 %v297
    %v361 = vpop.xlane.xlu0 %360
    %362 = vadd.xlane.f32.xlu0 %v299
    %v363 = vpop.xlane.xlu0 %362
    %364 = vadd.xlane.f32.xlu0 %v301
    %v365 = vpop.xlane.xlu0 %364
    %366 = vadd.xlane.f32.xlu0 %v303
    %v367 = vpop.xlane.xlu0 %366
    %368 = vadd.xlane.f32.xlu0 %v305
    %v369 = vpop.xlane.xlu0 %368
    %v370 = vlog2.pop %v307
    %v371 = vmul.f32 %v370, 0.6931472
    %v372 = vlog2.pop %v309
    %v373 = vmul.f32 %v372, 0.6931472
    %v374 = vlog2.pop %v311
    %v375 = vmul.f32 %v374, 0.6931472
    %v376 = vlog2.pop %v313
    %v377 = vmul.f32 %v376, 0.6931472
    %v378 = vlog2.pop %v315
    %v379 = vmul.f32 %v378, 0.6931472
    %v380 = vlog2.pop %v317
    %v381 = vmul.f32 %v380, 0.6931472
    %v382 = vlog2.pop %v319
    %v383 = vmul.f32 %v382, 0.6931472
    %v384 = vlog2.pop %v321
    %v385 = vmul.f32 %v384, 0.6931472
    %v386 = vlog2.pop %v323
    %v387 = vmul.f32 %v386, 0.6931472
    %v388 = vlog2.pop %v325
    %v389 = vmul.f32 %v388, 0.6931472
    %v390 = vlog2.pop %v327
    %v391 = vmul.f32 %v390, 0.6931472
    %v392 = vlog2.pop %v329
    %v393 = vmul.f32 %v392, 0.6931472
    %v394 = vlog2.pop %v331
    %v395 = vmul.f32 %v394, 0.6931472
    %v396 = vlog2.pop %v333
    %v397 = vmul.f32 %v396, 0.6931472
    %v398 = vlog2.pop %v335
    %v399 = vmul.f32 %v398, 0.6931472
    %v400 = vlog2.pop %v337
    %v401 = vmul.f32 %v400, 0.6931472
    %v402 = vlog2.pop %v339
    %v403 = vmul.f32 %v402, 0.6931472
    %v404 = vlog2.pop %v341
    %v405 = vmul.f32 %v404, 0.6931472
    %v406 = vlog2.pop %v343
    %v407 = vmul.f32 %v406, 0.6931472
    %v408 = vlog2.pop %v345
    %v409 = vmul.f32 %v408, 0.6931472
    %v410 = vlog2.pop %v347
    %v411 = vmul.f32 %v410, 0.6931472
    %v412 = vlog2.pop %v349
    %v413 = vmul.f32 %v412, 0.6931472
    %v414 = vlog2.pop %v351
    %v415 = vmul.f32 %v414, 0.6931472
    %v416 = vlog2.pop %v353
    %v417 = vmul.f32 %v416, 0.6931472
    %v418 = vlog2.pop %v355
    %v419 = vmul.f32 %v418, 0.6931472
    %v420 = vlog2.pop %v357
    %v421 = vmul.f32 %v420, 0.6931472
    %v422 = vlog2.pop %v359
    %v423 = vmul.f32 %v422, 0.6931472
    %v424 = vlog2.pop %v361
    %v425 = vmul.f32 %v424, 0.6931472
    %v426 = vlog2.pop %v363
    %v427 = vmul.f32 %v426, 0.6931472
    %v428 = vlog2.pop %v365
    %v429 = vmul.f32 %v428, 0.6931472
    %v430 = vlog2.pop %v367
    %v431 = vmul.f32 %v430, 0.6931472
    %v432 = vlog2.pop %v369
    %v433 = vmul.f32 %v432, 0.6931472
    %v434 = vlaneseq
    %v435 = vand.u32 %v434, 127
    %436 = vset.pattern.permute.xlu0 0
    %437 = vperm.xlu0 %436, %v114
    %v438 = vpop.permute.xlu0 %437
    %439 = vset.pattern.permute.xlu0 0
    %440 = vperm.xlu0 %439, %v115
    %v441 = vpop.permute.xlu0 %440
    %442 = vset.pattern.permute.xlu0 0
    %443 = vperm.xlu0 %442, %v116
    %v444 = vpop.permute.xlu0 %443
    %445 = vset.pattern.permute.xlu0 0
    %446 = vperm.xlu0 %445, %v117
    %v447 = vpop.permute.xlu0 %446
    %448 = vset.pattern.permute.xlu0 0
    %449 = vperm.xlu0 %448, %v118
    %v450 = vpop.permute.xlu0 %449
    %451 = vset.pattern.permute.xlu0 0
    %452 = vperm.xlu0 %451, %v119
    %v453 = vpop.permute.xlu0 %452
    %454 = vset.pattern.permute.xlu0 0
    %455 = vperm.xlu0 %454, %v120
    %v456 = vpop.permute.xlu0 %455
    %457 = vset.pattern.permute.xlu0 0
    %458 = vperm.xlu0 %457, %v121
    %v459 = vpop.permute.xlu0 %458
    %460 = vset.pattern.permute.xlu0 0
    %461 = vperm.xlu0 %460, %v122
    %v462 = vpop.permute.xlu0 %461
    %463 = vset.pattern.permute.xlu0 0
    %464 = vperm.xlu0 %463, %v123
    %v465 = vpop.permute.xlu0 %464
    %466 = vset.pattern.permute.xlu0 0
    %467 = vperm.xlu0 %466, %v124
    %v468 = vpop.permute.xlu0 %467
    %469 = vset.pattern.permute.xlu0 0
    %470 = vperm.xlu0 %469, %v125
    %v471 = vpop.permute.xlu0 %470
    %472 = vset.pattern.permute.xlu0 0
    %473 = vperm.xlu0 %472, %v126
    %v474 = vpop.permute.xlu0 %473
    %475 = vset.pattern.permute.xlu0 0
    %476 = vperm.xlu0 %475, %v127
    %v477 = vpop.permute.xlu0 %476
    %478 = vset.pattern.permute.xlu0 0
    %479 = vperm.xlu0 %478, %v128
    %v480 = vpop.permute.xlu0 %479
    %481 = vset.pattern.permute.xlu0 0
    %482 = vperm.xlu0 %481, %v129
    %v483 = vpop.permute.xlu0 %482
    %484 = vset.pattern.permute.xlu0 0
    %485 = vperm.xlu0 %484, %v130
    %v486 = vpop.permute.xlu0 %485
    %487 = vset.pattern.permute.xlu0 0
    %488 = vperm.xlu0 %487, %v131
    %v489 = vpop.permute.xlu0 %488
    %490 = vset.pattern.permute.xlu0 0
    %491 = vperm.xlu0 %490, %v132
    %v492 = vpop.permute.xlu0 %491
    %493 = vset.pattern.permute.xlu0 0
    %494 = vperm.xlu0 %493, %v133
    %v495 = vpop.permute.xlu0 %494
    %496 = vset.pattern.permute.xlu0 0
    %497 = vperm.xlu0 %496, %v134
    %v498 = vpop.permute.xlu0 %497
    %499 = vset.pattern.permute.xlu0 0
    %500 = vperm.xlu0 %499, %v135
    %v501 = vpop.permute.xlu0 %500
    %502 = vset.pattern.permute.xlu0 0
    %503 = vperm.xlu0 %502, %v136
    %v504 = vpop.permute.xlu0 %503
    %505 = vset.pattern.permute.xlu0 0
    %506 = vperm.xlu0 %505, %v137
    %v507 = vpop.permute.xlu0 %506
    %508 = vset.pattern.permute.xlu0 0
    %509 = vperm.xlu0 %508, %v138
    %v510 = vpop.permute.xlu0 %509
    %511 = vset.pattern.permute.xlu0 0
    %512 = vperm.xlu0 %511, %v139
    %v513 = vpop.permute.xlu0 %512
    %514 = vset.pattern.permute.xlu0 0
    %515 = vperm.xlu0 %514, %v140
    %v516 = vpop.permute.xlu0 %515
    %517 = vset.pattern.permute.xlu0 0
    %518 = vperm.xlu0 %517, %v141
    %v519 = vpop.permute.xlu0 %518
    %520 = vset.pattern.permute.xlu0 0
    %521 = vperm.xlu0 %520, %v142
    %v522 = vpop.permute.xlu0 %521
    %523 = vset.pattern.permute.xlu0 0
    %524 = vperm.xlu0 %523, %v143
    %v525 = vpop.permute.xlu0 %524
    %526 = vset.pattern.permute.xlu0 0
    %527 = vperm.xlu0 %526, %v144
    %v528 = vpop.permute.xlu0 %527
    %529 = vset.pattern.permute.xlu0 0
    %530 = vperm.xlu0 %529, %v145
    %v531 = vpop.permute.xlu0 %530
    %vm532 = vcmp.eq.s32.totalorder %v435, %v438
    %vm533 = vcmp.eq.s32.totalorder %v435, %v441
    %vm534 = vcmp.eq.s32.totalorder %v435, %v444
    %vm535 = vcmp.eq.s32.totalorder %v435, %v447
    %vm536 = vcmp.eq.s32.totalorder %v435, %v450
    %vm537 = vcmp.eq.s32.totalorder %v435, %v453
    %vm538 = vcmp.eq.s32.totalorder %v435, %v456
    %vm539 = vcmp.eq.s32.totalorder %v435, %v459
    %vm540 = vcmp.eq.s32.totalorder %v435, %v462
    %vm541 = vcmp.eq.s32.totalorder %v435, %v465
    %vm542 = vcmp.eq.s32.totalorder %v435, %v468
    %vm543 = vcmp.eq.s32.totalorder %v435, %v471
    %vm544 = vcmp.eq.s32.totalorder %v435, %v474
    %vm545 = vcmp.eq.s32.totalorder %v435, %v477
    %vm546 = vcmp.eq.s32.totalorder %v435, %v480
    %vm547 = vcmp.eq.s32.totalorder %v435, %v483
    %vm548 = vcmp.eq.s32.totalorder %v435, %v486
    %vm549 = vcmp.eq.s32.totalorder %v435, %v489
    %vm550 = vcmp.eq.s32.totalorder %v435, %v492
    %vm551 = vcmp.eq.s32.totalorder %v435, %v495
    %vm552 = vcmp.eq.s32.totalorder %v435, %v498
    %vm553 = vcmp.eq.s32.totalorder %v435, %v501
    %vm554 = vcmp.eq.s32.totalorder %v435, %v504
    %vm555 = vcmp.eq.s32.totalorder %v435, %v507
    %vm556 = vcmp.eq.s32.totalorder %v435, %v510
    %vm557 = vcmp.eq.s32.totalorder %v435, %v513
    %vm558 = vcmp.eq.s32.totalorder %v435, %v516
    %vm559 = vcmp.eq.s32.totalorder %v435, %v519
    %vm560 = vcmp.eq.s32.totalorder %v435, %v522
    %vm561 = vcmp.eq.s32.totalorder %v435, %v525
    %vm562 = vcmp.eq.s32.totalorder %v435, %v528
    %vm563 = vcmp.eq.s32.totalorder %v435, %v531
    %v564 = vsel %vm532, %v210, 0.0
    %v565 = vsel %vm533, %v211, 0.0
    %v566 = vsel %vm534, %v212, 0.0
    %v567 = vsel %vm535, %v213, 0.0
    %v568 = vsel %vm536, %v214, 0.0
    %v569 = vsel %vm537, %v215, 0.0
    %v570 = vsel %vm538, %v216, 0.0
    %v571 = vsel %vm539, %v217, 0.0
    %v572 = vsel %vm540, %v218, 0.0
    %v573 = vsel %vm541, %v219, 0.0
    %v574 = vsel %vm542, %v220, 0.0
    %v575 = vsel %vm543, %v221, 0.0
    %v576 = vsel %vm544, %v222, 0.0
    %v577 = vsel %vm545, %v223, 0.0
    %v578 = vsel %vm546, %v224, 0.0
    %v579 = vsel %vm547, %v225, 0.0
    %v580 = vsel %vm548, %v226, 0.0
    %v581 = vsel %vm549, %v227, 0.0
    %v582 = vsel %vm550, %v228, 0.0
    %v583 = vsel %vm551, %v229, 0.0
    %v584 = vsel %vm552, %v230, 0.0
    %v585 = vsel %vm553, %v231, 0.0
    %v586 = vsel %vm554, %v232, 0.0
    %v587 = vsel %vm555, %v233, 0.0
    %v588 = vsel %vm556, %v234, 0.0
    %v589 = vsel %vm557, %v235, 0.0
    %v590 = vsel %vm558, %v236, 0.0
    %v591 = vsel %vm559, %v237, 0.0
    %v592 = vsel %vm560, %v238, 0.0
    %v593 = vsel %vm561, %v239, 0.0
    %v594 = vsel %vm562, %v240, 0.0
    %v595 = vsel %vm563, %v241, 0.0
    %596 = vadd.xlane.f32.xlu0 %v564
    %v597 = vpop.xlane.xlu0 %596
    %598 = vadd.xlane.f32.xlu0 %v565
    %v599 = vpop.xlane.xlu0 %598
    %600 = vadd.xlane.f32.xlu0 %v566
    %v601 = vpop.xlane.xlu0 %600
    %602 = vadd.xlane.f32.xlu0 %v567
    %v603 = vpop.xlane.xlu0 %602
    %604 = vadd.xlane.f32.xlu0 %v568
    %v605 = vpop.xlane.xlu0 %604
    %606 = vadd.xlane.f32.xlu0 %v569
    %v607 = vpop.xlane.xlu0 %606
    %608 = vadd.xlane.f32.xlu0 %v570
    %v609 = vpop.xlane.xlu0 %608
    %610 = vadd.xlane.f32.xlu0 %v571
    %v611 = vpop.xlane.xlu0 %610
    %612 = vadd.xlane.f32.xlu0 %v572
    %v613 = vpop.xlane.xlu0 %612
    %614 = vadd.xlane.f32.xlu0 %v573
    %v615 = vpop.xlane.xlu0 %614
    %616 = vadd.xlane.f32.xlu0 %v574
    %v617 = vpop.xlane.xlu0 %616
    %618 = vadd.xlane.f32.xlu0 %v575
    %v619 = vpop.xlane.xlu0 %618
    %620 = vadd.xlane.f32.xlu0 %v576
    %v621 = vpop.xlane.xlu0 %620
    %622 = vadd.xlane.f32.xlu0 %v577
    %v623 = vpop.xlane.xlu0 %622
    %624 = vadd.xlane.f32.xlu0 %v578
    %v625 = vpop.xlane.xlu0 %624
    %626 = vadd.xlane.f32.xlu0 %v579
    %v627 = vpop.xlane.xlu0 %626
    %628 = vadd.xlane.f32.xlu0 %v580
    %v629 = vpop.xlane.xlu0 %628
    %630 = vadd.xlane.f32.xlu0 %v581
    %v631 = vpop.xlane.xlu0 %630
    %632 = vadd.xlane.f32.xlu0 %v582
    %v633 = vpop.xlane.xlu0 %632
    %634 = vadd.xlane.f32.xlu0 %v583
    %v635 = vpop.xlane.xlu0 %634
    %636 = vadd.xlane.f32.xlu0 %v584
    %v637 = vpop.xlane.xlu0 %636
    %638 = vadd.xlane.f32.xlu0 %v585
    %v639 = vpop.xlane.xlu0 %638
    %640 = vadd.xlane.f32.xlu0 %v586
    %v641 = vpop.xlane.xlu0 %640
    %642 = vadd.xlane.f32.xlu0 %v587
    %v643 = vpop.xlane.xlu0 %642
    %644 = vadd.xlane.f32.xlu0 %v588
    %v645 = vpop.xlane.xlu0 %644
    %646 = vadd.xlane.f32.xlu0 %v589
    %v647 = vpop.xlane.xlu0 %646
    %648 = vadd.xlane.f32.xlu0 %v590
    %v649 = vpop.xlane.xlu0 %648
    %650 = vadd.xlane.f32.xlu0 %v591
    %v651 = vpop.xlane.xlu0 %650
    %652 = vadd.xlane.f32.xlu0 %v592
    %v653 = vpop.xlane.xlu0 %652
    %654 = vadd.xlane.f32.xlu0 %v593
    %v655 = vpop.xlane.xlu0 %654
    %656 = vadd.xlane.f32.xlu0 %v594
    %v657 = vpop.xlane.xlu0 %656
    %658 = vadd.xlane.f32.xlu0 %v595
    %v659 = vpop.xlane.xlu0 %658
    %v660 = vsub.f32 %v371, %v597
    %v661 = vsub.f32 %v373, %v599
    %v662 = vsub.f32 %v375, %v601
    %v663 = vsub.f32 %v377, %v603
    %v664 = vsub.f32 %v379, %v605
    %v665 = vsub.f32 %v381, %v607
    %v666 = vsub.f32 %v383, %v609
    %v667 = vsub.f32 %v385, %v611
    %v668 = vsub.f32 %v387, %v613
    %v669 = vsub.f32 %v389, %v615
    %v670 = vsub.f32 %v391, %v617
    %v671 = vsub.f32 %v393, %v619
    %v672 = vsub.f32 %v395, %v621
    %v673 = vsub.f32 %v397, %v623
    %v674 = vsub.f32 %v399, %v625
    %v675 = vsub.f32 %v401, %v627
    %v676 = vsub.f32 %v403, %v629
    %v677 = vsub.f32 %v405, %v631
    %v678 = vsub.f32 %v407, %v633
    %v679 = vsub.f32 %v409, %v635
    %v680 = vsub.f32 %v411, %v637
    %v681 = vsub.f32 %v413, %v639
    %v682 = vsub.f32 %v415, %v641
    %v683 = vsub.f32 %v417, %v643
    %v684 = vsub.f32 %v419, %v645
    %v685 = vsub.f32 %v421, %v647
    %v686 = vsub.f32 %v423, %v649
    %v687 = vsub.f32 %v425, %v651
    %v688 = vsub.f32 %v427, %v653
    %v689 = vsub.f32 %v429, %v655
    %v690 = vsub.f32 %v431, %v657
    %v691 = vsub.f32 %v433, %v659
    %v692 = vsub.f32 0.0, %v660
    %v693 = vsub.f32 0.0, %v661
    %v694 = vsub.f32 0.0, %v662
    %v695 = vsub.f32 0.0, %v663
    %v696 = vsub.f32 0.0, %v664
    %v697 = vsub.f32 0.0, %v665
    %v698 = vsub.f32 0.0, %v666
    %v699 = vsub.f32 0.0, %v667
    %v700 = vsub.f32 0.0, %v668
    %v701 = vsub.f32 0.0, %v669
    %v702 = vsub.f32 0.0, %v670
    %v703 = vsub.f32 0.0, %v671
    %v704 = vsub.f32 0.0, %v672
    %v705 = vsub.f32 0.0, %v673
    %v706 = vsub.f32 0.0, %v674
    %v707 = vsub.f32 0.0, %v675
    %v708 = vsub.f32 0.0, %v676
    %v709 = vsub.f32 0.0, %v677
    %v710 = vsub.f32 0.0, %v678
    %v711 = vsub.f32 0.0, %v679
    %v712 = vsub.f32 0.0, %v680
    %v713 = vsub.f32 0.0, %v681
    %v714 = vsub.f32 0.0, %v682
    %v715 = vsub.f32 0.0, %v683
    %v716 = vsub.f32 0.0, %v684
    %v717 = vsub.f32 0.0, %v685
    %v718 = vsub.f32 0.0, %v686
    %v719 = vsub.f32 0.0, %v687
    %v720 = vsub.f32 0.0, %v688
    %v721 = vsub.f32 0.0, %v689
    %v722 = vsub.f32 0.0, %v690
    %v723 = vsub.f32 0.0, %v691
    %v724 = vmul.f32 %v692, 1.442695
    %v725 = vpow.pop %v724
    %v726 = vmul.f32 %v693, 1.442695
    %v727 = vpow.pop %v726
    %v728 = vmul.f32 %v694, 1.442695
    %v729 = vpow.pop %v728
    %v730 = vmul.f32 %v695, 1.442695
    %v731 = vpow.pop %v730
    %v732 = vmul.f32 %v696, 1.442695
    %v733 = vpow.pop %v732
    %v734 = vmul.f32 %v697, 1.442695
    %v735 = vpow.pop %v734
    %v736 = vmul.f32 %v698, 1.442695
    %v737 = vpow.pop %v736
    %v738 = vmul.f32 %v699, 1.442695
    %v739 = vpow.pop %v738
    %v740 = vmul.f32 %v700, 1.442695
    %v741 = vpow.pop %v740
    %v742 = vmul.f32 %v701, 1.442695
    %v743 = vpow.pop %v742
    %v744 = vmul.f32 %v702, 1.442695
    %v745 = vpow.pop %v744
    %v746 = vmul.f32 %v703, 1.442695
    %v747 = vpow.pop %v746
    %v748 = vmul.f32 %v704, 1.442695
    %v749 = vpow.pop %v748
    %v750 = vmul.f32 %v705, 1.442695
    %v751 = vpow.pop %v750
    %v752 = vmul.f32 %v706, 1.442695
    %v753 = vpow.pop %v752
    %v754 = vmul.f32 %v707, 1.442695
    %v755 = vpow.pop %v754
    %v756 = vmul.f32 %v708, 1.442695
    %v757 = vpow.pop %v756
    %v758 = vmul.f32 %v709, 1.442695
    %v759 = vpow.pop %v758
    %v760 = vmul.f32 %v710, 1.442695
    %v761 = vpow.pop %v760
    %v762 = vmul.f32 %v711, 1.442695
    %v763 = vpow.pop %v762
    %v764 = vmul.f32 %v712, 1.442695
    %v765 = vpow.pop %v764
    %v766 = vmul.f32 %v713, 1.442695
    %v767 = vpow.pop %v766
    %v768 = vmul.f32 %v714, 1.442695
    %v769 = vpow.pop %v768
    %v770 = vmul.f32 %v715, 1.442695
    %v771 = vpow.pop %v770
    %v772 = vmul.f32 %v716, 1.442695
    %v773 = vpow.pop %v772
    %v774 = vmul.f32 %v717, 1.442695
    %v775 = vpow.pop %v774
    %v776 = vmul.f32 %v718, 1.442695
    %v777 = vpow.pop %v776
    %v778 = vmul.f32 %v719, 1.442695
    %v779 = vpow.pop %v778
    %v780 = vmul.f32 %v720, 1.442695
    %v781 = vpow.pop %v780
    %v782 = vmul.f32 %v721, 1.442695
    %v783 = vpow.pop %v782
    %v784 = vmul.f32 %v722, 1.442695
    %v785 = vpow.pop %v784
    %v786 = vmul.f32 %v723, 1.442695
    %v787 = vpow.pop %v786
    %v788 = vsub.f32 1.0, %v725
    %v789 = vsub.f32 1.0, %v727
    %v790 = vsub.f32 1.0, %v729
    %v791 = vsub.f32 1.0, %v731
    %v792 = vsub.f32 1.0, %v733
    %v793 = vsub.f32 1.0, %v735
    %v794 = vsub.f32 1.0, %v737
    %v795 = vsub.f32 1.0, %v739
    %v796 = vsub.f32 1.0, %v741
    %v797 = vsub.f32 1.0, %v743
    %v798 = vsub.f32 1.0, %v745
    %v799 = vsub.f32 1.0, %v747
    %v800 = vsub.f32 1.0, %v749
    %v801 = vsub.f32 1.0, %v751
    %v802 = vsub.f32 1.0, %v753
    %v803 = vsub.f32 1.0, %v755
    %v804 = vsub.f32 1.0, %v757
    %v805 = vsub.f32 1.0, %v759
    %v806 = vsub.f32 1.0, %v761
    %v807 = vsub.f32 1.0, %v763
    %v808 = vsub.f32 1.0, %v765
    %v809 = vsub.f32 1.0, %v767
    %v810 = vsub.f32 1.0, %v769
    %v811 = vsub.f32 1.0, %v771
    %v812 = vsub.f32 1.0, %v773
    %v813 = vsub.f32 1.0, %v775
    %v814 = vsub.f32 1.0, %v777
    %v815 = vsub.f32 1.0, %v779
    %v816 = vsub.f32 1.0, %v781
    %v817 = vsub.f32 1.0, %v783
    %v818 = vsub.f32 1.0, %v785
    %v819 = vsub.f32 1.0, %v787
    %vm820 = vcmp.gt.f32.partialorder %v725, 0.0
    %vm821 = vcmp.gt.f32.partialorder %v727, 0.0
    %vm822 = vcmp.gt.f32.partialorder %v729, 0.0
    %vm823 = vcmp.gt.f32.partialorder %v731, 0.0
    %vm824 = vcmp.gt.f32.partialorder %v733, 0.0
    %vm825 = vcmp.gt.f32.partialorder %v735, 0.0
    %vm826 = vcmp.gt.f32.partialorder %v737, 0.0
    %vm827 = vcmp.gt.f32.partialorder %v739, 0.0
    %vm828 = vcmp.gt.f32.partialorder %v741, 0.0
    %vm829 = vcmp.gt.f32.partialorder %v743, 0.0
    %vm830 = vcmp.gt.f32.partialorder %v745, 0.0
    %vm831 = vcmp.gt.f32.partialorder %v747, 0.0
    %vm832 = vcmp.gt.f32.partialorder %v749, 0.0
    %vm833 = vcmp.gt.f32.partialorder %v751, 0.0
    %vm834 = vcmp.gt.f32.partialorder %v753, 0.0
    %vm835 = vcmp.gt.f32.partialorder %v755, 0.0
    %vm836 = vcmp.gt.f32.partialorder %v757, 0.0
    %vm837 = vcmp.gt.f32.partialorder %v759, 0.0
    %vm838 = vcmp.gt.f32.partialorder %v761, 0.0
    %vm839 = vcmp.gt.f32.partialorder %v763, 0.0
    %vm840 = vcmp.gt.f32.partialorder %v765, 0.0
    %vm841 = vcmp.gt.f32.partialorder %v767, 0.0
    %vm842 = vcmp.gt.f32.partialorder %v769, 0.0
    %vm843 = vcmp.gt.f32.partialorder %v771, 0.0
    %vm844 = vcmp.gt.f32.partialorder %v773, 0.0
    %vm845 = vcmp.gt.f32.partialorder %v775, 0.0
    %vm846 = vcmp.gt.f32.partialorder %v777, 0.0
    %vm847 = vcmp.gt.f32.partialorder %v779, 0.0
    %vm848 = vcmp.gt.f32.partialorder %v781, 0.0
    %vm849 = vcmp.gt.f32.partialorder %v783, 0.0
    %vm850 = vcmp.gt.f32.partialorder %v785, 0.0
    %vm851 = vcmp.gt.f32.partialorder %v787, 0.0
    %v852 = vsel %vm820, %v725, 1.0
    %v853 = vsel %vm821, %v727, 1.0
    %v854 = vsel %vm822, %v729, 1.0
    %v855 = vsel %vm823, %v731, 1.0
    %v856 = vsel %vm824, %v733, 1.0
    %v857 = vsel %vm825, %v735, 1.0
    %v858 = vsel %vm826, %v737, 1.0
    %v859 = vsel %vm827, %v739, 1.0
    %v860 = vsel %vm828, %v741, 1.0
    %v861 = vsel %vm829, %v743, 1.0
    %v862 = vsel %vm830, %v745, 1.0
    %v863 = vsel %vm831, %v747, 1.0
    %v864 = vsel %vm832, %v749, 1.0
    %v865 = vsel %vm833, %v751, 1.0
    %v866 = vsel %vm834, %v753, 1.0
    %v867 = vsel %vm835, %v755, 1.0
    %v868 = vsel %vm836, %v757, 1.0
    %v869 = vsel %vm837, %v759, 1.0
    %v870 = vsel %vm838, %v761, 1.0
    %v871 = vsel %vm839, %v763, 1.0
    %v872 = vsel %vm840, %v765, 1.0
    %v873 = vsel %vm841, %v767, 1.0
    %v874 = vsel %vm842, %v769, 1.0
    %v875 = vsel %vm843, %v771, 1.0
    %v876 = vsel %vm844, %v773, 1.0
    %v877 = vsel %vm845, %v775, 1.0
    %v878 = vsel %vm846, %v777, 1.0
    %v879 = vsel %vm847, %v779, 1.0
    %v880 = vsel %vm848, %v781, 1.0
    %v881 = vsel %vm849, %v783, 1.0
    %v882 = vsel %vm850, %v785, 1.0
    %v883 = vsel %vm851, %v787, 1.0
    %v884 = vlog2.pop %v852
    %v885 = vmul.f32 %v884, 0.6931472
    %v886 = vlog2.pop %v853
    %v887 = vmul.f32 %v886, 0.6931472
    %v888 = vlog2.pop %v854
    %v889 = vmul.f32 %v888, 0.6931472
    %v890 = vlog2.pop %v855
    %v891 = vmul.f32 %v890, 0.6931472
    %v892 = vlog2.pop %v856
    %v893 = vmul.f32 %v892, 0.6931472
    %v894 = vlog2.pop %v857
    %v895 = vmul.f32 %v894, 0.6931472
    %v896 = vlog2.pop %v858
    %v897 = vmul.f32 %v896, 0.6931472
    %v898 = vlog2.pop %v859
    %v899 = vmul.f32 %v898, 0.6931472
    %v900 = vlog2.pop %v860
    %v901 = vmul.f32 %v900, 0.6931472
    %v902 = vlog2.pop %v861
    %v903 = vmul.f32 %v902, 0.6931472
    %v904 = vlog2.pop %v862
    %v905 = vmul.f32 %v904, 0.6931472
    %v906 = vlog2.pop %v863
    %v907 = vmul.f32 %v906, 0.6931472
    %v908 = vlog2.pop %v864
    %v909 = vmul.f32 %v908, 0.6931472
    %v910 = vlog2.pop %v865
    %v911 = vmul.f32 %v910, 0.6931472
    %v912 = vlog2.pop %v866
    %v913 = vmul.f32 %v912, 0.6931472
    %v914 = vlog2.pop %v867
    %v915 = vmul.f32 %v914, 0.6931472
    %v916 = vlog2.pop %v868
    %v917 = vmul.f32 %v916, 0.6931472
    %v918 = vlog2.pop %v869
    %v919 = vmul.f32 %v918, 0.6931472
    %v920 = vlog2.pop %v870
    %v921 = vmul.f32 %v920, 0.6931472
    %v922 = vlog2.pop %v871
    %v923 = vmul.f32 %v922, 0.6931472
    %v924 = vlog2.pop %v872
    %v925 = vmul.f32 %v924, 0.6931472
    %v926 = vlog2.pop %v873
    %v927 = vmul.f32 %v926, 0.6931472
    %v928 = vlog2.pop %v874
    %v929 = vmul.f32 %v928, 0.6931472
    %v930 = vlog2.pop %v875
    %v931 = vmul.f32 %v930, 0.6931472
    %v932 = vlog2.pop %v876
    %v933 = vmul.f32 %v932, 0.6931472
    %v934 = vlog2.pop %v877
    %v935 = vmul.f32 %v934, 0.6931472
    %v936 = vlog2.pop %v878
    %v937 = vmul.f32 %v936, 0.6931472
    %v938 = vlog2.pop %v879
    %v939 = vmul.f32 %v938, 0.6931472
    %v940 = vlog2.pop %v880
    %v941 = vmul.f32 %v940, 0.6931472
    %v942 = vlog2.pop %v881
    %v943 = vmul.f32 %v942, 0.6931472
    %v944 = vlog2.pop %v882
    %v945 = vmul.f32 %v944, 0.6931472
    %v946 = vlog2.pop %v883
    %v947 = vmul.f32 %v946, 0.6931472
    %vm948 = vcmp.ne.f32.partialorder %v885, 0.0
    %vm949 = vcmp.ne.f32.partialorder %v887, 0.0
    %vm950 = vcmp.ne.f32.partialorder %v889, 0.0
    %vm951 = vcmp.ne.f32.partialorder %v891, 0.0
    %vm952 = vcmp.ne.f32.partialorder %v893, 0.0
    %vm953 = vcmp.ne.f32.partialorder %v895, 0.0
    %vm954 = vcmp.ne.f32.partialorder %v897, 0.0
    %vm955 = vcmp.ne.f32.partialorder %v899, 0.0
    %vm956 = vcmp.ne.f32.partialorder %v901, 0.0
    %vm957 = vcmp.ne.f32.partialorder %v903, 0.0
    %vm958 = vcmp.ne.f32.partialorder %v905, 0.0
    %vm959 = vcmp.ne.f32.partialorder %v907, 0.0
    %vm960 = vcmp.ne.f32.partialorder %v909, 0.0
    %vm961 = vcmp.ne.f32.partialorder %v911, 0.0
    %vm962 = vcmp.ne.f32.partialorder %v913, 0.0
    %vm963 = vcmp.ne.f32.partialorder %v915, 0.0
    %vm964 = vcmp.ne.f32.partialorder %v917, 0.0
    %vm965 = vcmp.ne.f32.partialorder %v919, 0.0
    %vm966 = vcmp.ne.f32.partialorder %v921, 0.0
    %vm967 = vcmp.ne.f32.partialorder %v923, 0.0
    %vm968 = vcmp.ne.f32.partialorder %v925, 0.0
    %vm969 = vcmp.ne.f32.partialorder %v927, 0.0
    %vm970 = vcmp.ne.f32.partialorder %v929, 0.0
    %vm971 = vcmp.ne.f32.partialorder %v931, 0.0
    %vm972 = vcmp.ne.f32.partialorder %v933, 0.0
    %vm973 = vcmp.ne.f32.partialorder %v935, 0.0
    %vm974 = vcmp.ne.f32.partialorder %v937, 0.0
    %vm975 = vcmp.ne.f32.partialorder %v939, 0.0
    %vm976 = vcmp.ne.f32.partialorder %v941, 0.0
    %vm977 = vcmp.ne.f32.partialorder %v943, 0.0
    %vm978 = vcmp.ne.f32.partialorder %v945, 0.0
    %vm979 = vcmp.ne.f32.partialorder %v947, 0.0
    %v980 = vsub.f32 0.0, %v885
    %v981 = vsub.f32 0.0, %v887
    %v982 = vsub.f32 0.0, %v889
    %v983 = vsub.f32 0.0, %v891
    %v984 = vsub.f32 0.0, %v893
    %v985 = vsub.f32 0.0, %v895
    %v986 = vsub.f32 0.0, %v897
    %v987 = vsub.f32 0.0, %v899
    %v988 = vsub.f32 0.0, %v901
    %v989 = vsub.f32 0.0, %v903
    %v990 = vsub.f32 0.0, %v905
    %v991 = vsub.f32 0.0, %v907
    %v992 = vsub.f32 0.0, %v909
    %v993 = vsub.f32 0.0, %v911
    %v994 = vsub.f32 0.0, %v913
    %v995 = vsub.f32 0.0, %v915
    %v996 = vsub.f32 0.0, %v917
    %v997 = vsub.f32 0.0, %v919
    %v998 = vsub.f32 0.0, %v921
    %v999 = vsub.f32 0.0, %v923
    %v1000 = vsub.f32 0.0, %v925
    %v1001 = vsub.f32 0.0, %v927
    %v1002 = vsub.f32 0.0, %v929
    %v1003 = vsub.f32 0.0, %v931
    %v1004 = vsub.f32 0.0, %v933
    %v1005 = vsub.f32 0.0, %v935
    %v1006 = vsub.f32 0.0, %v937
    %v1007 = vsub.f32 0.0, %v939
    %v1008 = vsub.f32 0.0, %v941
    %v1009 = vsub.f32 0.0, %v943
    %v1010 = vsub.f32 0.0, %v945
    %v1011 = vsub.f32 0.0, %v947
    %v1012 = vsel %vm948, %v980, 1.0
    %v1013 = vsel %vm949, %v981, 1.0
    %v1014 = vsel %vm950, %v982, 1.0
    %v1015 = vsel %vm951, %v983, 1.0
    %v1016 = vsel %vm952, %v984, 1.0
    %v1017 = vsel %vm953, %v985, 1.0
    %v1018 = vsel %vm954, %v986, 1.0
    %v1019 = vsel %vm955, %v987, 1.0
    %v1020 = vsel %vm956, %v988, 1.0
    %v1021 = vsel %vm957, %v989, 1.0
    %v1022 = vsel %vm958, %v990, 1.0
    %v1023 = vsel %vm959, %v991, 1.0
    %v1024 = vsel %vm960, %v992, 1.0
    %v1025 = vsel %vm961, %v993, 1.0
    %v1026 = vsel %vm962, %v994, 1.0
    %v1027 = vsel %vm963, %v995, 1.0
    %v1028 = vsel %vm964, %v996, 1.0
    %v1029 = vsel %vm965, %v997, 1.0
    %v1030 = vsel %vm966, %v998, 1.0
    %v1031 = vsel %vm967, %v999, 1.0
    %v1032 = vsel %vm968, %v1000, 1.0
    %v1033 = vsel %vm969, %v1001, 1.0
    %v1034 = vsel %vm970, %v1002, 1.0
    %v1035 = vsel %vm971, %v1003, 1.0
    %v1036 = vsel %vm972, %v1004, 1.0
    %v1037 = vsel %vm973, %v1005, 1.0
    %v1038 = vsel %vm974, %v1006, 1.0
    %v1039 = vsel %vm975, %v1007, 1.0
    %v1040 = vsel %vm976, %v1008, 1.0
    %v1041 = vsel %vm977, %v1009, 1.0
    %v1042 = vsel %vm978, %v1010, 1.0
    %v1043 = vsel %vm979, %v1011, 1.0
    %v1044 = vmul.f32 %v788, %v660
    %v1045 = vmul.f32 %v789, %v661
    %v1046 = vmul.f32 %v790, %v662
    %v1047 = vmul.f32 %v791, %v663
    %v1048 = vmul.f32 %v792, %v664
    %v1049 = vmul.f32 %v793, %v665
    %v1050 = vmul.f32 %v794, %v666
    %v1051 = vmul.f32 %v795, %v667
    %v1052 = vmul.f32 %v796, %v668
    %v1053 = vmul.f32 %v797, %v669
    %v1054 = vmul.f32 %v798, %v670
    %v1055 = vmul.f32 %v799, %v671
    %v1056 = vmul.f32 %v800, %v672
    %v1057 = vmul.f32 %v801, %v673
    %v1058 = vmul.f32 %v802, %v674
    %v1059 = vmul.f32 %v803, %v675
    %v1060 = vmul.f32 %v804, %v676
    %v1061 = vmul.f32 %v805, %v677
    %v1062 = vmul.f32 %v806, %v678
    %v1063 = vmul.f32 %v807, %v679
    %v1064 = vmul.f32 %v808, %v680
    %v1065 = vmul.f32 %v809, %v681
    %v1066 = vmul.f32 %v810, %v682
    %v1067 = vmul.f32 %v811, %v683
    %v1068 = vmul.f32 %v812, %v684
    %v1069 = vmul.f32 %v813, %v685
    %v1070 = vmul.f32 %v814, %v686
    %v1071 = vmul.f32 %v815, %v687
    %v1072 = vmul.f32 %v816, %v688
    %v1073 = vmul.f32 %v817, %v689
    %v1074 = vmul.f32 %v818, %v690
    %v1075 = vmul.f32 %v819, %v691
    %v1076 = vrcp.pop %v1012
    %v1077 = vmul.f32 %v1012, %v1076
    %v1078 = vsub.f32 1.0, %v1077
    %v1079 = vmul.f32 %v1076, %v1078
    %v1080 = vadd.f32 %v1076, %v1079
    %vm1081 = vweird.f32 %v1012
    %vm1082 = vweird.f32 %v1076
    %vm1083 = vmor %vm1081, %vm1082
    %v1084 = vsel %vm1083, %v1076, %v1080
    %v1085 = vand.u32 2147483647, %v1012
    %vm1086 = vcmp.eq.f32.partialorder %v1085, 8.507059e+37
    %v1087 = vand.u32 %v1012, 2147483648
    %v1088 = vor.u32 1.1754944e-38, %v1087
    %v1089 = vsel %vm1086, %v1088, %v1084
    %v1090 = vmul.f32 %v1044, %v1089
    %v1091 = vrcp.pop %v1013
    %v1092 = vmul.f32 %v1013, %v1091
    %v1093 = vsub.f32 1.0, %v1092
    %v1094 = vmul.f32 %v1091, %v1093
    %v1095 = vadd.f32 %v1091, %v1094
    %vm1096 = vweird.f32 %v1013
    %vm1097 = vweird.f32 %v1091
    %vm1098 = vmor %vm1096, %vm1097
    %v1099 = vsel %vm1098, %v1091, %v1095
    %v1100 = vand.u32 2147483647, %v1013
    %vm1101 = vcmp.eq.f32.partialorder %v1100, 8.507059e+37
    %v1102 = vand.u32 %v1013, 2147483648
    %v1103 = vor.u32 1.1754944e-38, %v1102
    %v1104 = vsel %vm1101, %v1103, %v1099
    %v1105 = vmul.f32 %v1045, %v1104
    %v1106 = vrcp.pop %v1014
    %v1107 = vmul.f32 %v1014, %v1106
    %v1108 = vsub.f32 1.0, %v1107
    %v1109 = vmul.f32 %v1106, %v1108
    %v1110 = vadd.f32 %v1106, %v1109
    %vm1111 = vweird.f32 %v1014
    %vm1112 = vweird.f32 %v1106
    %vm1113 = vmor %vm1111, %vm1112
    %v1114 = vsel %vm1113, %v1106, %v1110
    %v1115 = vand.u32 2147483647, %v1014
    %vm1116 = vcmp.eq.f32.partialorder %v1115, 8.507059e+37
    %v1117 = vand.u32 %v1014, 2147483648
    %v1118 = vor.u32 1.1754944e-38, %v1117
    %v1119 = vsel %vm1116, %v1118, %v1114
    %v1120 = vmul.f32 %v1046, %v1119
    %v1121 = vrcp.pop %v1015
    %v1122 = vmul.f32 %v1015, %v1121
    %v1123 = vsub.f32 1.0, %v1122
    %v1124 = vmul.f32 %v1121, %v1123
    %v1125 = vadd.f32 %v1121, %v1124
    %vm1126 = vweird.f32 %v1015
    %vm1127 = vweird.f32 %v1121
    %vm1128 = vmor %vm1126, %vm1127
    %v1129 = vsel %vm1128, %v1121, %v1125
    %v1130 = vand.u32 2147483647, %v1015
    %vm1131 = vcmp.eq.f32.partialorder %v1130, 8.507059e+37
    %v1132 = vand.u32 %v1015, 2147483648
    %v1133 = vor.u32 1.1754944e-38, %v1132
    %v1134 = vsel %vm1131, %v1133, %v1129
    %v1135 = vmul.f32 %v1047, %v1134
    %v1136 = vrcp.pop %v1016
    %v1137 = vmul.f32 %v1016, %v1136
    %v1138 = vsub.f32 1.0, %v1137
    %v1139 = vmul.f32 %v1136, %v1138
    %v1140 = vadd.f32 %v1136, %v1139
    %vm1141 = vweird.f32 %v1016
    %vm1142 = vweird.f32 %v1136
    %vm1143 = vmor %vm1141, %vm1142
    %v1144 = vsel %vm1143, %v1136, %v1140
    %v1145 = vand.u32 2147483647, %v1016
    %vm1146 = vcmp.eq.f32.partialorder %v1145, 8.507059e+37
    %v1147 = vand.u32 %v1016, 2147483648
    %v1148 = vor.u32 1.1754944e-38, %v1147
    %v1149 = vsel %vm1146, %v1148, %v1144
    %v1150 = vmul.f32 %v1048, %v1149
    %v1151 = vrcp.pop %v1017
    %v1152 = vmul.f32 %v1017, %v1151
    %v1153 = vsub.f32 1.0, %v1152
    %v1154 = vmul.f32 %v1151, %v1153
    %v1155 = vadd.f32 %v1151, %v1154
    %vm1156 = vweird.f32 %v1017
    %vm1157 = vweird.f32 %v1151
    %vm1158 = vmor %vm1156, %vm1157
    %v1159 = vsel %vm1158, %v1151, %v1155
    %v1160 = vand.u32 2147483647, %v1017
    %vm1161 = vcmp.eq.f32.partialorder %v1160, 8.507059e+37
    %v1162 = vand.u32 %v1017, 2147483648
    %v1163 = vor.u32 1.1754944e-38, %v1162
    %v1164 = vsel %vm1161, %v1163, %v1159
    %v1165 = vmul.f32 %v1049, %v1164
    %v1166 = vrcp.pop %v1018
    %v1167 = vmul.f32 %v1018, %v1166
    %v1168 = vsub.f32 1.0, %v1167
    %v1169 = vmul.f32 %v1166, %v1168
    %v1170 = vadd.f32 %v1166, %v1169
    %vm1171 = vweird.f32 %v1018
    %vm1172 = vweird.f32 %v1166
    %vm1173 = vmor %vm1171, %vm1172
    %v1174 = vsel %vm1173, %v1166, %v1170
    %v1175 = vand.u32 2147483647, %v1018
    %vm1176 = vcmp.eq.f32.partialorder %v1175, 8.507059e+37
    %v1177 = vand.u32 %v1018, 2147483648
    %v1178 = vor.u32 1.1754944e-38, %v1177
    %v1179 = vsel %vm1176, %v1178, %v1174
    %v1180 = vmul.f32 %v1050, %v1179
    %v1181 = vrcp.pop %v1019
    %v1182 = vmul.f32 %v1019, %v1181
    %v1183 = vsub.f32 1.0, %v1182
    %v1184 = vmul.f32 %v1181, %v1183
    %v1185 = vadd.f32 %v1181, %v1184
    %vm1186 = vweird.f32 %v1019
    %vm1187 = vweird.f32 %v1181
    %vm1188 = vmor %vm1186, %vm1187
    %v1189 = vsel %vm1188, %v1181, %v1185
    %v1190 = vand.u32 2147483647, %v1019
    %vm1191 = vcmp.eq.f32.partialorder %v1190, 8.507059e+37
    %v1192 = vand.u32 %v1019, 2147483648
    %v1193 = vor.u32 1.1754944e-38, %v1192
    %v1194 = vsel %vm1191, %v1193, %v1189
    %v1195 = vmul.f32 %v1051, %v1194
    %v1196 = vrcp.pop %v1020
    %v1197 = vmul.f32 %v1020, %v1196
    %v1198 = vsub.f32 1.0, %v1197
    %v1199 = vmul.f32 %v1196, %v1198
    %v1200 = vadd.f32 %v1196, %v1199
    %vm1201 = vweird.f32 %v1020
    %vm1202 = vweird.f32 %v1196
    %vm1203 = vmor %vm1201, %vm1202
    %v1204 = vsel %vm1203, %v1196, %v1200
    %v1205 = vand.u32 2147483647, %v1020
    %vm1206 = vcmp.eq.f32.partialorder %v1205, 8.507059e+37
    %v1207 = vand.u32 %v1020, 2147483648
    %v1208 = vor.u32 1.1754944e-38, %v1207
    %v1209 = vsel %vm1206, %v1208, %v1204
    %v1210 = vmul.f32 %v1052, %v1209
    %v1211 = vrcp.pop %v1021
    %v1212 = vmul.f32 %v1021, %v1211
    %v1213 = vsub.f32 1.0, %v1212
    %v1214 = vmul.f32 %v1211, %v1213
    %v1215 = vadd.f32 %v1211, %v1214
    %vm1216 = vweird.f32 %v1021
    %vm1217 = vweird.f32 %v1211
    %vm1218 = vmor %vm1216, %vm1217
    %v1219 = vsel %vm1218, %v1211, %v1215
    %v1220 = vand.u32 2147483647, %v1021
    %vm1221 = vcmp.eq.f32.partialorder %v1220, 8.507059e+37
    %v1222 = vand.u32 %v1021, 2147483648
    %v1223 = vor.u32 1.1754944e-38, %v1222
    %v1224 = vsel %vm1221, %v1223, %v1219
    %v1225 = vmul.f32 %v1053, %v1224
    %v1226 = vrcp.pop %v1022
    %v1227 = vmul.f32 %v1022, %v1226
    %v1228 = vsub.f32 1.0, %v1227
    %v1229 = vmul.f32 %v1226, %v1228
    %v1230 = vadd.f32 %v1226, %v1229
    %vm1231 = vweird.f32 %v1022
    %vm1232 = vweird.f32 %v1226
    %vm1233 = vmor %vm1231, %vm1232
    %v1234 = vsel %vm1233, %v1226, %v1230
    %v1235 = vand.u32 2147483647, %v1022
    %vm1236 = vcmp.eq.f32.partialorder %v1235, 8.507059e+37
    %v1237 = vand.u32 %v1022, 2147483648
    %v1238 = vor.u32 1.1754944e-38, %v1237
    %v1239 = vsel %vm1236, %v1238, %v1234
    %v1240 = vmul.f32 %v1054, %v1239
    %v1241 = vrcp.pop %v1023
    %v1242 = vmul.f32 %v1023, %v1241
    %v1243 = vsub.f32 1.0, %v1242
    %v1244 = vmul.f32 %v1241, %v1243
    %v1245 = vadd.f32 %v1241, %v1244
    %vm1246 = vweird.f32 %v1023
    %vm1247 = vweird.f32 %v1241
    %vm1248 = vmor %vm1246, %vm1247
    %v1249 = vsel %vm1248, %v1241, %v1245
    %v1250 = vand.u32 2147483647, %v1023
    %vm1251 = vcmp.eq.f32.partialorder %v1250, 8.507059e+37
    %v1252 = vand.u32 %v1023, 2147483648
    %v1253 = vor.u32 1.1754944e-38, %v1252
    %v1254 = vsel %vm1251, %v1253, %v1249
    %v1255 = vmul.f32 %v1055, %v1254
    %v1256 = vrcp.pop %v1024
    %v1257 = vmul.f32 %v1024, %v1256
    %v1258 = vsub.f32 1.0, %v1257
    %v1259 = vmul.f32 %v1256, %v1258
    %v1260 = vadd.f32 %v1256, %v1259
    %vm1261 = vweird.f32 %v1024
    %vm1262 = vweird.f32 %v1256
    %vm1263 = vmor %vm1261, %vm1262
    %v1264 = vsel %vm1263, %v1256, %v1260
    %v1265 = vand.u32 2147483647, %v1024
    %vm1266 = vcmp.eq.f32.partialorder %v1265, 8.507059e+37
    %v1267 = vand.u32 %v1024, 2147483648
    %v1268 = vor.u32 1.1754944e-38, %v1267
    %v1269 = vsel %vm1266, %v1268, %v1264
    %v1270 = vmul.f32 %v1056, %v1269
    %v1271 = vrcp.pop %v1025
    %v1272 = vmul.f32 %v1025, %v1271
    %v1273 = vsub.f32 1.0, %v1272
    %v1274 = vmul.f32 %v1271, %v1273
    %v1275 = vadd.f32 %v1271, %v1274
    %vm1276 = vweird.f32 %v1025
    %vm1277 = vweird.f32 %v1271
    %vm1278 = vmor %vm1276, %vm1277
    %v1279 = vsel %vm1278, %v1271, %v1275
    %v1280 = vand.u32 2147483647, %v1025
    %vm1281 = vcmp.eq.f32.partialorder %v1280, 8.507059e+37
    %v1282 = vand.u32 %v1025, 2147483648
    %v1283 = vor.u32 1.1754944e-38, %v1282
    %v1284 = vsel %vm1281, %v1283, %v1279
    %v1285 = vmul.f32 %v1057, %v1284
    %v1286 = vrcp.pop %v1026
    %v1287 = vmul.f32 %v1026, %v1286
    %v1288 = vsub.f32 1.0, %v1287
    %v1289 = vmul.f32 %v1286, %v1288
    %v1290 = vadd.f32 %v1286, %v1289
    %vm1291 = vweird.f32 %v1026
    %vm1292 = vweird.f32 %v1286
    %vm1293 = vmor %vm1291, %vm1292
    %v1294 = vsel %vm1293, %v1286, %v1290
    %v1295 = vand.u32 2147483647, %v1026
    %vm1296 = vcmp.eq.f32.partialorder %v1295, 8.507059e+37
    %v1297 = vand.u32 %v1026, 2147483648
    %v1298 = vor.u32 1.1754944e-38, %v1297
    %v1299 = vsel %vm1296, %v1298, %v1294
    %v1300 = vmul.f32 %v1058, %v1299
    %v1301 = vrcp.pop %v1027
    %v1302 = vmul.f32 %v1027, %v1301
    %v1303 = vsub.f32 1.0, %v1302
    %v1304 = vmul.f32 %v1301, %v1303
    %v1305 = vadd.f32 %v1301, %v1304
    %vm1306 = vweird.f32 %v1027
    %vm1307 = vweird.f32 %v1301
    %vm1308 = vmor %vm1306, %vm1307
    %v1309 = vsel %vm1308, %v1301, %v1305
    %v1310 = vand.u32 2147483647, %v1027
    %vm1311 = vcmp.eq.f32.partialorder %v1310, 8.507059e+37
    %v1312 = vand.u32 %v1027, 2147483648
    %v1313 = vor.u32 1.1754944e-38, %v1312
    %v1314 = vsel %vm1311, %v1313, %v1309
    %v1315 = vmul.f32 %v1059, %v1314
    %v1316 = vrcp.pop %v1028
    %v1317 = vmul.f32 %v1028, %v1316
    %v1318 = vsub.f32 1.0, %v1317
    %v1319 = vmul.f32 %v1316, %v1318
    %v1320 = vadd.f32 %v1316, %v1319
    %vm1321 = vweird.f32 %v1028
    %vm1322 = vweird.f32 %v1316
    %vm1323 = vmor %vm1321, %vm1322
    %v1324 = vsel %vm1323, %v1316, %v1320
    %v1325 = vand.u32 2147483647, %v1028
    %vm1326 = vcmp.eq.f32.partialorder %v1325, 8.507059e+37
    %v1327 = vand.u32 %v1028, 2147483648
    %v1328 = vor.u32 1.1754944e-38, %v1327
    %v1329 = vsel %vm1326, %v1328, %v1324
    %v1330 = vmul.f32 %v1060, %v1329
    %v1331 = vrcp.pop %v1029
    %v1332 = vmul.f32 %v1029, %v1331
    %v1333 = vsub.f32 1.0, %v1332
    %v1334 = vmul.f32 %v1331, %v1333
    %v1335 = vadd.f32 %v1331, %v1334
    %vm1336 = vweird.f32 %v1029
    %vm1337 = vweird.f32 %v1331
    %vm1338 = vmor %vm1336, %vm1337
    %v1339 = vsel %vm1338, %v1331, %v1335
    %v1340 = vand.u32 2147483647, %v1029
    %vm1341 = vcmp.eq.f32.partialorder %v1340, 8.507059e+37
    %v1342 = vand.u32 %v1029, 2147483648
    %v1343 = vor.u32 1.1754944e-38, %v1342
    %v1344 = vsel %vm1341, %v1343, %v1339
    %v1345 = vmul.f32 %v1061, %v1344
    %v1346 = vrcp.pop %v1030
    %v1347 = vmul.f32 %v1030, %v1346
    %v1348 = vsub.f32 1.0, %v1347
    %v1349 = vmul.f32 %v1346, %v1348
    %v1350 = vadd.f32 %v1346, %v1349
    %vm1351 = vweird.f32 %v1030
    %vm1352 = vweird.f32 %v1346
    %vm1353 = vmor %vm1351, %vm1352
    %v1354 = vsel %vm1353, %v1346, %v1350
    %v1355 = vand.u32 2147483647, %v1030
    %vm1356 = vcmp.eq.f32.partialorder %v1355, 8.507059e+37
    %v1357 = vand.u32 %v1030, 2147483648
    %v1358 = vor.u32 1.1754944e-38, %v1357
    %v1359 = vsel %vm1356, %v1358, %v1354
    %v1360 = vmul.f32 %v1062, %v1359
    %v1361 = vrcp.pop %v1031
    %v1362 = vmul.f32 %v1031, %v1361
    %v1363 = vsub.f32 1.0, %v1362
    %v1364 = vmul.f32 %v1361, %v1363
    %v1365 = vadd.f32 %v1361, %v1364
    %vm1366 = vweird.f32 %v1031
    %vm1367 = vweird.f32 %v1361
    %vm1368 = vmor %vm1366, %vm1367
    %v1369 = vsel %vm1368, %v1361, %v1365
    %v1370 = vand.u32 2147483647, %v1031
    %vm1371 = vcmp.eq.f32.partialorder %v1370, 8.507059e+37
    %v1372 = vand.u32 %v1031, 2147483648
    %v1373 = vor.u32 1.1754944e-38, %v1372
    %v1374 = vsel %vm1371, %v1373, %v1369
    %v1375 = vmul.f32 %v1063, %v1374
    %v1376 = vrcp.pop %v1032
    %v1377 = vmul.f32 %v1032, %v1376
    %v1378 = vsub.f32 1.0, %v1377
    %v1379 = vmul.f32 %v1376, %v1378
    %v1380 = vadd.f32 %v1376, %v1379
    %vm1381 = vweird.f32 %v1032
    %vm1382 = vweird.f32 %v1376
    %vm1383 = vmor %vm1381, %vm1382
    %v1384 = vsel %vm1383, %v1376, %v1380
    %v1385 = vand.u32 2147483647, %v1032
    %vm1386 = vcmp.eq.f32.partialorder %v1385, 8.507059e+37
    %v1387 = vand.u32 %v1032, 2147483648
    %v1388 = vor.u32 1.1754944e-38, %v1387
    %v1389 = vsel %vm1386, %v1388, %v1384
    %v1390 = vmul.f32 %v1064, %v1389
    %v1391 = vrcp.pop %v1033
    %v1392 = vmul.f32 %v1033, %v1391
    %v1393 = vsub.f32 1.0, %v1392
    %v1394 = vmul.f32 %v1391, %v1393
    %v1395 = vadd.f32 %v1391, %v1394
    %vm1396 = vweird.f32 %v1033
    %vm1397 = vweird.f32 %v1391
    %vm1398 = vmor %vm1396, %vm1397
    %v1399 = vsel %vm1398, %v1391, %v1395
    %v1400 = vand.u32 2147483647, %v1033
    %vm1401 = vcmp.eq.f32.partialorder %v1400, 8.507059e+37
    %v1402 = vand.u32 %v1033, 2147483648
    %v1403 = vor.u32 1.1754944e-38, %v1402
    %v1404 = vsel %vm1401, %v1403, %v1399
    %v1405 = vmul.f32 %v1065, %v1404
    %v1406 = vrcp.pop %v1034
    %v1407 = vmul.f32 %v1034, %v1406
    %v1408 = vsub.f32 1.0, %v1407
    %v1409 = vmul.f32 %v1406, %v1408
    %v1410 = vadd.f32 %v1406, %v1409
    %vm1411 = vweird.f32 %v1034
    %vm1412 = vweird.f32 %v1406
    %vm1413 = vmor %vm1411, %vm1412
    %v1414 = vsel %vm1413, %v1406, %v1410
    %v1415 = vand.u32 2147483647, %v1034
    %vm1416 = vcmp.eq.f32.partialorder %v1415, 8.507059e+37
    %v1417 = vand.u32 %v1034, 2147483648
    %v1418 = vor.u32 1.1754944e-38, %v1417
    %v1419 = vsel %vm1416, %v1418, %v1414
    %v1420 = vmul.f32 %v1066, %v1419
    %v1421 = vrcp.pop %v1035
    %v1422 = vmul.f32 %v1035, %v1421
    %v1423 = vsub.f32 1.0, %v1422
    %v1424 = vmul.f32 %v1421, %v1423
    %v1425 = vadd.f32 %v1421, %v1424
    %vm1426 = vweird.f32 %v1035
    %vm1427 = vweird.f32 %v1421
    %vm1428 = vmor %vm1426, %vm1427
    %v1429 = vsel %vm1428, %v1421, %v1425
    %v1430 = vand.u32 2147483647, %v1035
    %vm1431 = vcmp.eq.f32.partialorder %v1430, 8.507059e+37
    %v1432 = vand.u32 %v1035, 2147483648
    %v1433 = vor.u32 1.1754944e-38, %v1432
    %v1434 = vsel %vm1431, %v1433, %v1429
    %v1435 = vmul.f32 %v1067, %v1434
    %v1436 = vrcp.pop %v1036
    %v1437 = vmul.f32 %v1036, %v1436
    %v1438 = vsub.f32 1.0, %v1437
    %v1439 = vmul.f32 %v1436, %v1438
    %v1440 = vadd.f32 %v1436, %v1439
    %vm1441 = vweird.f32 %v1036
    %vm1442 = vweird.f32 %v1436
    %vm1443 = vmor %vm1441, %vm1442
    %v1444 = vsel %vm1443, %v1436, %v1440
    %v1445 = vand.u32 2147483647, %v1036
    %vm1446 = vcmp.eq.f32.partialorder %v1445, 8.507059e+37
    %v1447 = vand.u32 %v1036, 2147483648
    %v1448 = vor.u32 1.1754944e-38, %v1447
    %v1449 = vsel %vm1446, %v1448, %v1444
    %v1450 = vmul.f32 %v1068, %v1449
    %v1451 = vrcp.pop %v1037
    %v1452 = vmul.f32 %v1037, %v1451
    %v1453 = vsub.f32 1.0, %v1452
    %v1454 = vmul.f32 %v1451, %v1453
    %v1455 = vadd.f32 %v1451, %v1454
    %vm1456 = vweird.f32 %v1037
    %vm1457 = vweird.f32 %v1451
    %vm1458 = vmor %vm1456, %vm1457
    %v1459 = vsel %vm1458, %v1451, %v1455
    %v1460 = vand.u32 2147483647, %v1037
    %vm1461 = vcmp.eq.f32.partialorder %v1460, 8.507059e+37
    %v1462 = vand.u32 %v1037, 2147483648
    %v1463 = vor.u32 1.1754944e-38, %v1462
    %v1464 = vsel %vm1461, %v1463, %v1459
    %v1465 = vmul.f32 %v1069, %v1464
    %v1466 = vrcp.pop %v1038
    %v1467 = vmul.f32 %v1038, %v1466
    %v1468 = vsub.f32 1.0, %v1467
    %v1469 = vmul.f32 %v1466, %v1468
    %v1470 = vadd.f32 %v1466, %v1469
    %vm1471 = vweird.f32 %v1038
    %vm1472 = vweird.f32 %v1466
    %vm1473 = vmor %vm1471, %vm1472
    %v1474 = vsel %vm1473, %v1466, %v1470
    %v1475 = vand.u32 2147483647, %v1038
    %vm1476 = vcmp.eq.f32.partialorder %v1475, 8.507059e+37
    %v1477 = vand.u32 %v1038, 2147483648
    %v1478 = vor.u32 1.1754944e-38, %v1477
    %v1479 = vsel %vm1476, %v1478, %v1474
    %v1480 = vmul.f32 %v1070, %v1479
    %v1481 = vrcp.pop %v1039
    %v1482 = vmul.f32 %v1039, %v1481
    %v1483 = vsub.f32 1.0, %v1482
    %v1484 = vmul.f32 %v1481, %v1483
    %v1485 = vadd.f32 %v1481, %v1484
    %vm1486 = vweird.f32 %v1039
    %vm1487 = vweird.f32 %v1481
    %vm1488 = vmor %vm1486, %vm1487
    %v1489 = vsel %vm1488, %v1481, %v1485
    %v1490 = vand.u32 2147483647, %v1039
    %vm1491 = vcmp.eq.f32.partialorder %v1490, 8.507059e+37
    %v1492 = vand.u32 %v1039, 2147483648
    %v1493 = vor.u32 1.1754944e-38, %v1492
    %v1494 = vsel %vm1491, %v1493, %v1489
    %v1495 = vmul.f32 %v1071, %v1494
    %v1496 = vrcp.pop %v1040
    %v1497 = vmul.f32 %v1040, %v1496
    %v1498 = vsub.f32 1.0, %v1497
    %v1499 = vmul.f32 %v1496, %v1498
    %v1500 = vadd.f32 %v1496, %v1499
    %vm1501 = vweird.f32 %v1040
    %vm1502 = vweird.f32 %v1496
    %vm1503 = vmor %vm1501, %vm1502
    %v1504 = vsel %vm1503, %v1496, %v1500
    %v1505 = vand.u32 2147483647, %v1040
    %vm1506 = vcmp.eq.f32.partialorder %v1505, 8.507059e+37
    %v1507 = vand.u32 %v1040, 2147483648
    %v1508 = vor.u32 1.1754944e-38, %v1507
    %v1509 = vsel %vm1506, %v1508, %v1504
    %v1510 = vmul.f32 %v1072, %v1509
    %v1511 = vrcp.pop %v1041
    %v1512 = vmul.f32 %v1041, %v1511
    %v1513 = vsub.f32 1.0, %v1512
    %v1514 = vmul.f32 %v1511, %v1513
    %v1515 = vadd.f32 %v1511, %v1514
    %vm1516 = vweird.f32 %v1041
    %vm1517 = vweird.f32 %v1511
    %vm1518 = vmor %vm1516, %vm1517
    %v1519 = vsel %vm1518, %v1511, %v1515
    %v1520 = vand.u32 2147483647, %v1041
    %vm1521 = vcmp.eq.f32.partialorder %v1520, 8.507059e+37
    %v1522 = vand.u32 %v1041, 2147483648
    %v1523 = vor.u32 1.1754944e-38, %v1522
    %v1524 = vsel %vm1521, %v1523, %v1519
    %v1525 = vmul.f32 %v1073, %v1524
    %v1526 = vrcp.pop %v1042
    %v1527 = vmul.f32 %v1042, %v1526
    %v1528 = vsub.f32 1.0, %v1527
    %v1529 = vmul.f32 %v1526, %v1528
    %v1530 = vadd.f32 %v1526, %v1529
    %vm1531 = vweird.f32 %v1042
    %vm1532 = vweird.f32 %v1526
    %vm1533 = vmor %vm1531, %vm1532
    %v1534 = vsel %vm1533, %v1526, %v1530
    %v1535 = vand.u32 2147483647, %v1042
    %vm1536 = vcmp.eq.f32.partialorder %v1535, 8.507059e+37
    %v1537 = vand.u32 %v1042, 2147483648
    %v1538 = vor.u32 1.1754944e-38, %v1537
    %v1539 = vsel %vm1536, %v1538, %v1534
    %v1540 = vmul.f32 %v1074, %v1539
    %v1541 = vrcp.pop %v1043
    %v1542 = vmul.f32 %v1043, %v1541
    %v1543 = vsub.f32 1.0, %v1542
    %v1544 = vmul.f32 %v1541, %v1543
    %v1545 = vadd.f32 %v1541, %v1544
    %vm1546 = vweird.f32 %v1043
    %vm1547 = vweird.f32 %v1541
    %vm1548 = vmor %vm1546, %vm1547
    %v1549 = vsel %vm1548, %v1541, %v1545
    %v1550 = vand.u32 2147483647, %v1043
    %vm1551 = vcmp.eq.f32.partialorder %v1550, 8.507059e+37
    %v1552 = vand.u32 %v1043, 2147483648
    %v1553 = vor.u32 1.1754944e-38, %v1552
    %v1554 = vsel %vm1551, %v1553, %v1549
    %v1555 = vmul.f32 %v1075, %v1554
    %vm1556 = vcmp.eq.f32.partialorder %v788, 0.0
    %vm1557 = vcmp.eq.f32.partialorder %v789, 0.0
    %vm1558 = vcmp.eq.f32.partialorder %v790, 0.0
    %vm1559 = vcmp.eq.f32.partialorder %v791, 0.0
    %vm1560 = vcmp.eq.f32.partialorder %v792, 0.0
    %vm1561 = vcmp.eq.f32.partialorder %v793, 0.0
    %vm1562 = vcmp.eq.f32.partialorder %v794, 0.0
    %vm1563 = vcmp.eq.f32.partialorder %v795, 0.0
    %vm1564 = vcmp.eq.f32.partialorder %v796, 0.0
    %vm1565 = vcmp.eq.f32.partialorder %v797, 0.0
    %vm1566 = vcmp.eq.f32.partialorder %v798, 0.0
    %vm1567 = vcmp.eq.f32.partialorder %v799, 0.0
    %vm1568 = vcmp.eq.f32.partialorder %v800, 0.0
    %vm1569 = vcmp.eq.f32.partialorder %v801, 0.0
    %vm1570 = vcmp.eq.f32.partialorder %v802, 0.0
    %vm1571 = vcmp.eq.f32.partialorder %v803, 0.0
    %vm1572 = vcmp.eq.f32.partialorder %v804, 0.0
    %vm1573 = vcmp.eq.f32.partialorder %v805, 0.0
    %vm1574 = vcmp.eq.f32.partialorder %v806, 0.0
    %vm1575 = vcmp.eq.f32.partialorder %v807, 0.0
    %vm1576 = vcmp.eq.f32.partialorder %v808, 0.0
    %vm1577 = vcmp.eq.f32.partialorder %v809, 0.0
    %vm1578 = vcmp.eq.f32.partialorder %v810, 0.0
    %vm1579 = vcmp.eq.f32.partialorder %v811, 0.0
    %vm1580 = vcmp.eq.f32.partialorder %v812, 0.0
    %vm1581 = vcmp.eq.f32.partialorder %v813, 0.0
    %vm1582 = vcmp.eq.f32.partialorder %v814, 0.0
    %vm1583 = vcmp.eq.f32.partialorder %v815, 0.0
    %vm1584 = vcmp.eq.f32.partialorder %v816, 0.0
    %vm1585 = vcmp.eq.f32.partialorder %v817, 0.0
    %vm1586 = vcmp.eq.f32.partialorder %v818, 0.0
    %vm1587 = vcmp.eq.f32.partialorder %v819, 0.0
    %v1588 = vsel %vm820, %v1090, 1.0
    %v1589 = vsel %vm821, %v1105, 1.0
    %v1590 = vsel %vm822, %v1120, 1.0
    %v1591 = vsel %vm823, %v1135, 1.0
    %v1592 = vsel %vm824, %v1150, 1.0
    %v1593 = vsel %vm825, %v1165, 1.0
    %v1594 = vsel %vm826, %v1180, 1.0
    %v1595 = vsel %vm827, %v1195, 1.0
    %v1596 = vsel %vm828, %v1210, 1.0
    %v1597 = vsel %vm829, %v1225, 1.0
    %v1598 = vsel %vm830, %v1240, 1.0
    %v1599 = vsel %vm831, %v1255, 1.0
    %v1600 = vsel %vm832, %v1270, 1.0
    %v1601 = vsel %vm833, %v1285, 1.0
    %v1602 = vsel %vm834, %v1300, 1.0
    %v1603 = vsel %vm835, %v1315, 1.0
    %v1604 = vsel %vm836, %v1330, 1.0
    %v1605 = vsel %vm837, %v1345, 1.0
    %v1606 = vsel %vm838, %v1360, 1.0
    %v1607 = vsel %vm839, %v1375, 1.0
    %v1608 = vsel %vm840, %v1390, 1.0
    %v1609 = vsel %vm841, %v1405, 1.0
    %v1610 = vsel %vm842, %v1420, 1.0
    %v1611 = vsel %vm843, %v1435, 1.0
    %v1612 = vsel %vm844, %v1450, 1.0
    %v1613 = vsel %vm845, %v1465, 1.0
    %v1614 = vsel %vm846, %v1480, 1.0
    %v1615 = vsel %vm847, %v1495, 1.0
    %v1616 = vsel %vm848, %v1510, 1.0
    %v1617 = vsel %vm849, %v1525, 1.0
    %v1618 = vsel %vm850, %v1540, 1.0
    %v1619 = vsel %vm851, %v1555, 1.0
    %v1620 = vsel %vm1556, %v660, %v1588
    %v1621 = vsel %vm1557, %v661, %v1589
    %v1622 = vsel %vm1558, %v662, %v1590
    %v1623 = vsel %vm1559, %v663, %v1591
    %v1624 = vsel %vm1560, %v664, %v1592
    %v1625 = vsel %vm1561, %v665, %v1593
    %v1626 = vsel %vm1562, %v666, %v1594
    %v1627 = vsel %vm1563, %v667, %v1595
    %v1628 = vsel %vm1564, %v668, %v1596
    %v1629 = vsel %vm1565, %v669, %v1597
    %v1630 = vsel %vm1566, %v670, %v1598
    %v1631 = vsel %vm1567, %v671, %v1599
    %v1632 = vsel %vm1568, %v672, %v1600
    %v1633 = vsel %vm1569, %v673, %v1601
    %v1634 = vsel %vm1570, %v674, %v1602
    %v1635 = vsel %vm1571, %v675, %v1603
    %v1636 = vsel %vm1572, %v676, %v1604
    %v1637 = vsel %vm1573, %v677, %v1605
    %v1638 = vsel %vm1574, %v678, %v1606
    %v1639 = vsel %vm1575, %v679, %v1607
    %v1640 = vsel %vm1576, %v680, %v1608
    %v1641 = vsel %vm1577, %v681, %v1609
    %v1642 = vsel %vm1578, %v682, %v1610
    %v1643 = vsel %vm1579, %v683, %v1611
    %v1644 = vsel %vm1580, %v684, %v1612
    %v1645 = vsel %vm1581, %v685, %v1613
    %v1646 = vsel %vm1582, %v686, %v1614
    %v1647 = vsel %vm1583, %v687, %v1615
    %v1648 = vsel %vm1584, %v688, %v1616
    %v1649 = vsel %vm1585, %v689, %v1617
    %v1650 = vsel %vm1586, %v690, %v1618
    %v1651 = vsel %vm1587, %v691, %v1619
    %v1652 = vmul.f32 %v1620, %v1620
    %v1653 = vmul.f32 %v1621, %v1621
    %v1654 = vmul.f32 %v1622, %v1622
    %v1655 = vmul.f32 %v1623, %v1623
    %v1656 = vmul.f32 %v1624, %v1624
    %v1657 = vmul.f32 %v1625, %v1625
    %v1658 = vmul.f32 %v1626, %v1626
    %v1659 = vmul.f32 %v1627, %v1627
    %v1660 = vmul.f32 %v1628, %v1628
    %v1661 = vmul.f32 %v1629, %v1629
    %v1662 = vmul.f32 %v1630, %v1630
    %v1663 = vmul.f32 %v1631, %v1631
    %v1664 = vmul.f32 %v1632, %v1632
    %v1665 = vmul.f32 %v1633, %v1633
    %v1666 = vmul.f32 %v1634, %v1634
    %v1667 = vmul.f32 %v1635, %v1635
    %v1668 = vmul.f32 %v1636, %v1636
    %v1669 = vmul.f32 %v1637, %v1637
    %v1670 = vmul.f32 %v1638, %v1638
    %v1671 = vmul.f32 %v1639, %v1639
    %v1672 = vmul.f32 %v1640, %v1640
    %v1673 = vmul.f32 %v1641, %v1641
    %v1674 = vmul.f32 %v1642, %v1642
    %v1675 = vmul.f32 %v1643, %v1643
    %v1676 = vmul.f32 %v1644, %v1644
    %v1677 = vmul.f32 %v1645, %v1645
    %v1678 = vmul.f32 %v1646, %v1646
    %v1679 = vmul.f32 %v1647, %v1647
    %v1680 = vmul.f32 %v1648, %v1648
    %v1681 = vmul.f32 %v1649, %v1649
    %v1682 = vmul.f32 %v1650, %v1650
    %v1683 = vmul.f32 %v1651, %v1651
    %v1684 = vmul.f32 %v1652, %v660
    %v1685 = vmul.f32 %v1653, %v661
    %v1686 = vmul.f32 %v1654, %v662
    %v1687 = vmul.f32 %v1655, %v663
    %v1688 = vmul.f32 %v1656, %v664
    %v1689 = vmul.f32 %v1657, %v665
    %v1690 = vmul.f32 %v1658, %v666
    %v1691 = vmul.f32 %v1659, %v667
    %v1692 = vmul.f32 %v1660, %v668
    %v1693 = vmul.f32 %v1661, %v669
    %v1694 = vmul.f32 %v1662, %v670
    %v1695 = vmul.f32 %v1663, %v671
    %v1696 = vmul.f32 %v1664, %v672
    %v1697 = vmul.f32 %v1665, %v673
    %v1698 = vmul.f32 %v1666, %v674
    %v1699 = vmul.f32 %v1667, %v675
    %v1700 = vmul.f32 %v1668, %v676
    %v1701 = vmul.f32 %v1669, %v677
    %v1702 = vmul.f32 %v1670, %v678
    %v1703 = vmul.f32 %v1671, %v679
    %v1704 = vmul.f32 %v1672, %v680
    %v1705 = vmul.f32 %v1673, %v681
    %v1706 = vmul.f32 %v1674, %v682
    %v1707 = vmul.f32 %v1675, %v683
    %v1708 = vmul.f32 %v1676, %v684
    %v1709 = vmul.f32 %v1677, %v685
    %v1710 = vmul.f32 %v1678, %v686
    %v1711 = vmul.f32 %v1679, %v687
    %v1712 = vmul.f32 %v1680, %v688
    %v1713 = vmul.f32 %v1681, %v689
    %v1714 = vmul.f32 %v1682, %v690
    %v1715 = vmul.f32 %v1683, %v691
    %s1716 = sadd.s32 0, 0
    %s1717 = smul.u32 %s1716, 256
    %v1718 = vlaneseq
    %v1719 = vshrl.u32 %v1718, 7
    %v1720 = vadd.s32 %v1719, 8
    %v1721 = vadd.s32 %v1719, 16
    %v1722 = vadd.s32 %v1719, 24
    %v1723 = vadd.s32 %v1719, 32
    %v1724 = vadd.s32 %v1719, 40
    %v1725 = vadd.s32 %v1719, 48
    %v1726 = vadd.s32 %v1719, 56
    %v1727 = vadd.s32 %v1719, 64
    %v1728 = vadd.s32 %v1719, 72
    %v1729 = vadd.s32 %v1719, 80
    %v1730 = vadd.s32 %v1719, 88
    %v1731 = vadd.s32 %v1719, 96
    %v1732 = vadd.s32 %v1719, 104
    %v1733 = vadd.s32 %v1719, 112
    %v1734 = vadd.s32 %v1719, 120
    %v1735 = vadd.s32 %v1719, 128
    %v1736 = vadd.s32 %v1719, 136
    %v1737 = vadd.s32 %v1719, 144
    %v1738 = vadd.s32 %v1719, 152
    %v1739 = vadd.s32 %v1719, 160
    %v1740 = vadd.s32 %v1719, 168
    %v1741 = vadd.s32 %v1719, 176
    %v1742 = vadd.s32 %v1719, 184
    %v1743 = vadd.s32 %v1719, 192
    %v1744 = vadd.s32 %v1719, 200
    %v1745 = vadd.s32 %v1719, 208
    %v1746 = vadd.s32 %v1719, 216
    %v1747 = vadd.s32 %v1719, 224
    %v1748 = vadd.s32 %v1719, 232
    %v1749 = vadd.s32 %v1719, 240
    %v1750 = vadd.s32 %v1719, 248
    %v1751 = vstv %s1717
    %v1752 = vadd.s32 %v1751, %v1719
    %v1753 = vadd.s32 %v1751, %v1720
    %v1754 = vadd.s32 %v1751, %v1721
    %v1755 = vadd.s32 %v1751, %v1722
    %v1756 = vadd.s32 %v1751, %v1723
    %v1757 = vadd.s32 %v1751, %v1724
    %v1758 = vadd.s32 %v1751, %v1725
    %v1759 = vadd.s32 %v1751, %v1726
    %v1760 = vadd.s32 %v1751, %v1727
    %v1761 = vadd.s32 %v1751, %v1728
    %v1762 = vadd.s32 %v1751, %v1729
    %v1763 = vadd.s32 %v1751, %v1730
    %v1764 = vadd.s32 %v1751, %v1731
    %v1765 = vadd.s32 %v1751, %v1732
    %v1766 = vadd.s32 %v1751, %v1733
    %v1767 = vadd.s32 %v1751, %v1734
    %v1768 = vadd.s32 %v1751, %v1735
    %v1769 = vadd.s32 %v1751, %v1736
    %v1770 = vadd.s32 %v1751, %v1737
    %v1771 = vadd.s32 %v1751, %v1738
    %v1772 = vadd.s32 %v1751, %v1739
    %v1773 = vadd.s32 %v1751, %v1740
    %v1774 = vadd.s32 %v1751, %v1741
    %v1775 = vadd.s32 %v1751, %v1742
    %v1776 = vadd.s32 %v1751, %v1743
    %v1777 = vadd.s32 %v1751, %v1744
    %v1778 = vadd.s32 %v1751, %v1745
    %v1779 = vadd.s32 %v1751, %v1746
    %v1780 = vadd.s32 %v1751, %v1747
    %v1781 = vadd.s32 %v1751, %v1748
    %v1782 = vadd.s32 %v1751, %v1749
    %v1783 = vadd.s32 %v1751, %v1750
    %vm1784 = vcmp.lt.s32.totalorder %v1752, 256
    %vm1785 = vcmp.lt.s32.totalorder %v1753, 256
    %vm1786 = vcmp.lt.s32.totalorder %v1754, 256
    %vm1787 = vcmp.lt.s32.totalorder %v1755, 256
    %vm1788 = vcmp.lt.s32.totalorder %v1756, 256
    %vm1789 = vcmp.lt.s32.totalorder %v1757, 256
    %vm1790 = vcmp.lt.s32.totalorder %v1758, 256
    %vm1791 = vcmp.lt.s32.totalorder %v1759, 256
    %vm1792 = vcmp.lt.s32.totalorder %v1760, 256
    %vm1793 = vcmp.lt.s32.totalorder %v1761, 256
    %vm1794 = vcmp.lt.s32.totalorder %v1762, 256
    %vm1795 = vcmp.lt.s32.totalorder %v1763, 256
    %vm1796 = vcmp.lt.s32.totalorder %v1764, 256
    %vm1797 = vcmp.lt.s32.totalorder %v1765, 256
    %vm1798 = vcmp.lt.s32.totalorder %v1766, 256
    %vm1799 = vcmp.lt.s32.totalorder %v1767, 256
    %vm1800 = vcmp.lt.s32.totalorder %v1768, 256
    %vm1801 = vcmp.lt.s32.totalorder %v1769, 256
    %vm1802 = vcmp.lt.s32.totalorder %v1770, 256
    %vm1803 = vcmp.lt.s32.totalorder %v1771, 256
    %vm1804 = vcmp.lt.s32.totalorder %v1772, 256
    %vm1805 = vcmp.lt.s32.totalorder %v1773, 256
    %vm1806 = vcmp.lt.s32.totalorder %v1774, 256
    %vm1807 = vcmp.lt.s32.totalorder %v1775, 256
    %vm1808 = vcmp.lt.s32.totalorder %v1776, 256
    %vm1809 = vcmp.lt.s32.totalorder %v1777, 256
    %vm1810 = vcmp.lt.s32.totalorder %v1778, 256
    %vm1811 = vcmp.lt.s32.totalorder %v1779, 256
    %vm1812 = vcmp.lt.s32.totalorder %v1780, 256
    %vm1813 = vcmp.lt.s32.totalorder %v1781, 256
    %vm1814 = vcmp.lt.s32.totalorder %v1782, 256
    %vm1815 = vcmp.lt.s32.totalorder %v1783, 256
    %v1816 = vsel %vm1784, %v1684, 0.0
    %v1817 = vsel %vm1785, %v1685, 0.0
    %v1818 = vsel %vm1786, %v1686, 0.0
    %v1819 = vsel %vm1787, %v1687, 0.0
    %v1820 = vsel %vm1788, %v1688, 0.0
    %v1821 = vsel %vm1789, %v1689, 0.0
    %v1822 = vsel %vm1790, %v1690, 0.0
    %v1823 = vsel %vm1791, %v1691, 0.0
    %v1824 = vsel %vm1792, %v1692, 0.0
    %v1825 = vsel %vm1793, %v1693, 0.0
    %v1826 = vsel %vm1794, %v1694, 0.0
    %v1827 = vsel %vm1795, %v1695, 0.0
    %v1828 = vsel %vm1796, %v1696, 0.0
    %v1829 = vsel %vm1797, %v1697, 0.0
    %v1830 = vsel %vm1798, %v1698, 0.0
    %v1831 = vsel %vm1799, %v1699, 0.0
    %v1832 = vsel %vm1800, %v1700, 0.0
    %v1833 = vsel %vm1801, %v1701, 0.0
    %v1834 = vsel %vm1802, %v1702, 0.0
    %v1835 = vsel %vm1803, %v1703, 0.0
    %v1836 = vsel %vm1804, %v1704, 0.0
    %v1837 = vsel %vm1805, %v1705, 0.0
    %v1838 = vsel %vm1806, %v1706, 0.0
    %v1839 = vsel %vm1807, %v1707, 0.0
    %v1840 = vsel %vm1808, %v1708, 0.0
    %v1841 = vsel %vm1809, %v1709, 0.0
    %v1842 = vsel %vm1810, %v1710, 0.0
    %v1843 = vsel %vm1811, %v1711, 0.0
    %v1844 = vsel %vm1812, %v1712, 0.0
    %v1845 = vsel %vm1813, %v1713, 0.0
    %v1846 = vsel %vm1814, %v1714, 0.0
    %v1847 = vsel %vm1815, %v1715, 0.0
    %v1848 = vld [vmem:[#allocation2] sm:$0x1]
    %vm1849 = vcmask 7168
    %v1850 = vsel %vm1849, %v1816, 0.0
    %v1851 = vsel %vm1849, %v1817, 0.0
    %v1852 = vadd.f32 %v1850, %v1851
    %v1853 = vsel %vm1849, %v1818, 0.0
    %v1854 = vadd.f32 %v1852, %v1853
    %v1855 = vsel %vm1849, %v1819, 0.0
    %v1856 = vadd.f32 %v1854, %v1855
    %v1857 = vsel %vm1849, %v1820, 0.0
    %v1858 = vadd.f32 %v1856, %v1857
    %v1859 = vsel %vm1849, %v1821, 0.0
    %v1860 = vadd.f32 %v1858, %v1859
    %v1861 = vsel %vm1849, %v1822, 0.0
    %v1862 = vadd.f32 %v1860, %v1861
    %v1863 = vsel %vm1849, %v1823, 0.0
    %v1864 = vadd.f32 %v1862, %v1863
    %v1865 = vsel %vm1849, %v1824, 0.0
    %v1866 = vadd.f32 %v1864, %v1865
    %v1867 = vsel %vm1849, %v1825, 0.0
    %v1868 = vadd.f32 %v1866, %v1867
    %v1869 = vsel %vm1849, %v1826, 0.0
    %v1870 = vadd.f32 %v1868, %v1869
    %v1871 = vsel %vm1849, %v1827, 0.0
    %v1872 = vadd.f32 %v1870, %v1871
    %v1873 = vsel %vm1849, %v1828, 0.0
    %v1874 = vadd.f32 %v1872, %v1873
    %v1875 = vsel %vm1849, %v1829, 0.0
    %v1876 = vadd.f32 %v1874, %v1875
    %v1877 = vsel %vm1849, %v1830, 0.0
    %v1878 = vadd.f32 %v1876, %v1877
    %v1879 = vsel %vm1849, %v1831, 0.0
    %v1880 = vadd.f32 %v1878, %v1879
    %v1881 = vsel %vm1849, %v1832, 0.0
    %v1882 = vadd.f32 %v1880, %v1881
    %v1883 = vsel %vm1849, %v1833, 0.0
    %v1884 = vadd.f32 %v1882, %v1883
    %v1885 = vsel %vm1849, %v1834, 0.0
    %v1886 = vadd.f32 %v1884, %v1885
    %v1887 = vsel %vm1849, %v1835, 0.0
    %v1888 = vadd.f32 %v1886, %v1887
    %v1889 = vsel %vm1849, %v1836, 0.0
    %v1890 = vadd.f32 %v1888, %v1889
    %v1891 = vsel %vm1849, %v1837, 0.0
    %v1892 = vadd.f32 %v1890, %v1891
    %v1893 = vsel %vm1849, %v1838, 0.0
    %v1894 = vadd.f32 %v1892, %v1893
    %v1895 = vsel %vm1849, %v1839, 0.0
    %v1896 = vadd.f32 %v1894, %v1895
    %v1897 = vsel %vm1849, %v1840, 0.0
    %v1898 = vadd.f32 %v1896, %v1897
    %v1899 = vsel %vm1849, %v1841, 0.0
    %v1900 = vadd.f32 %v1898, %v1899
    %v1901 = vsel %vm1849, %v1842, 0.0
    %v1902 = vadd.f32 %v1900, %v1901
    %v1903 = vsel %vm1849, %v1843, 0.0
    %v1904 = vadd.f32 %v1902, %v1903
    %v1905 = vsel %vm1849, %v1844, 0.0
    %v1906 = vadd.f32 %v1904, %v1905
    %v1907 = vsel %vm1849, %v1845, 0.0
    %v1908 = vadd.f32 %v1906, %v1907
    %v1909 = vsel %vm1849, %v1846, 0.0
    %v1910 = vadd.f32 %v1908, %v1909
    %v1911 = vsel %vm1849, %v1847, 0.0
    %v1912 = vadd.f32 %v1910, %v1911
    %1913 = vadd.xlane.f32.xlu0 %v1912
    %v1914 = vpop.xlane.xlu0 %1913
    %v1915 = vrot.slane %v1914, 4
    %v1916 = vadd.f32 %v1914, %v1915
    %v1917 = vrot.slane %v1916, 2
    %v1918 = vadd.f32 %v1916, %v1917
    %v1919 = vrot.slane %v1918, 1
    %v1920 = vadd.f32 %v1918, %v1919
    %s1921 = vtos %v1920
    %v1922 = vstv %s1921
    %v1923 = vadd.f32 %v1848, %v1922
    %vm1924 = vcmask 0
    %1925 = vst.msk [vmem:[#allocation2] sm:$0x1] %vm1924, %v1923
    // Predicated region
    $region14: #{tpu_custom_call.1} parent=1 // pred_check
      %p1926 = pneg %p76
    $region15: #{tpu_custom_call.1} parent=1 // pred_check_branch
      %1928 = sbr.rel (%p1926) target = $region17
    $region16: #{tpu_custom_call.1} parent=1 // pred_region
      %v1929 = vld [vmem:[#allocation2] sm:$0x1]
      %1930 = vst.msk [vmem:[#allocation3] sm:$0x1] %vm1924, %v1929
    $region17: #{tpu_custom_call.1} parent=1 // pred_fallthru
      _
    // Predicated region
    $region18: #{tpu_custom_call.1} parent=1 // pred_check
      _
    $region19: #{tpu_custom_call.1} parent=1 // pred_check_branch
      %1932 = sbr.rel (0) target = $region21
    $region20: #{tpu_custom_call.1} parent=1 // pred_region
      %1934 = vsyncadd [#allocation4], 0
      %s1936 = sshll.u32 [#allocation3], 4
      %s1937 = int_to_ptr.vmem [resolvable:$true] %s1936
      %s1938 = sshll.u32 %s2, 4
      %s1939 = int_to_ptr.hbm [resolvable:$true] %s1938
      %1941 = dma.vmem_to_hbm [thread:$0]  %s1937, 16, %s1939, [#allocation4]
    $region21: #{tpu_custom_call.1} parent=1 // pred_fallthru
      _
    // Predicated region
    $region22: #{tpu_custom_call.1} parent=1 // pred_check
      _
    $region23: #{tpu_custom_call.1} parent=1 // pred_check_branch
      %1943 = sbr.rel (0) target = $region25
    $region24: #{tpu_custom_call.1} parent=1 // pred_region
      %1945 = dma.done [#allocation4], 16
    $region25: #{tpu_custom_call.1} parent=1 // pred_fallthru
      _
    %1946 = vsyncpa [#allocation4], 1

</llo_original>
